<compile_context>
chip_gen: v7x
topology: tpu7x:2x2x1
jax: 0.10.0
libtpu: 0.0.40
codegen_flags: <defaults>
</compile_context>

<pallas_src>
import functools

import jax
import jax.numpy as jnp
from jax.experimental import pallas as pl
from jax.experimental.pallas import tpu as pltpu


# ----------------------------------------------------------------------------
# Kernel 1: scores = q @ k^T (MXU, non-transposed RHS) + diag(softmax(scores)).
# Single grid step; static Python loop over the (tiny) batch inside the kernel.
# ----------------------------------------------------------------------------
def _scores_diag_kernel(q_ref, kt_ref, scores_ref, diag_ref):
    b, n, _ = q_ref.shape
    rows = jax.lax.broadcasted_iota(jnp.int32, (n, n), 0)
    cols = jax.lax.broadcasted_iota(jnp.int32, (n, n), 1)
    eye = rows == cols

    for bi in range(b):  # static trip count — unrolled, no per-step DMA overhead
        # (N, D) x (D, N) -> (N, N); RHS already transposed in the wrapper.
        s = jax.lax.dot_general(
            q_ref[bi], kt_ref[bi], (((1,), (0,)), ((), ())),
            preferred_element_type=jnp.float32,
        )
        scores_ref[bi] = s.astype(scores_ref.dtype)

        # diag(softmax(s, axis=-1)) without materializing / writing probs.
        m = jnp.max(s, axis=-1, keepdims=True)                      # (N, 1)
        e = jnp.exp(s - m)                                          # (N, N)
        denom = jnp.sum(e, axis=-1, keepdims=True)                  # (N, 1)
        diag_e = jnp.sum(jnp.where(eye, e, 0.0), axis=-1, keepdims=True)
        diag_ref[bi] = (diag_e / denom).astype(diag_ref.dtype)      # (N, 1)


def _scores_and_diag(q, kt):
    b, n, d = q.shape
    flops = 2 * b * n * n * d + 6 * b * n * n
    bytes_accessed = 4 * (2 * b * n * d + b * n * n + b * n)
    return pl.pallas_call(
        _scores_diag_kernel,
        out_shape=(
            jax.ShapeDtypeStruct((b, n, n), jnp.float32),   # raw scores ("scores1")
            jax.ShapeDtypeStruct((b, n, 1), jnp.float32),   # diag(softmax(scores))
        ),
        grid=(1,),
        in_specs=[
            pl.BlockSpec((b, n, d), lambda i: (0, 0, 0)),
            pl.BlockSpec((b, d, n), lambda i: (0, 0, 0)),
        ],
        out_specs=(
            pl.BlockSpec((b, n, n), lambda i: (0, 0, 0)),
            pl.BlockSpec((b, n, 1), lambda i: (0, 0, 0)),
        ),
        compiler_params=pltpu.CompilerParams(dimension_semantics=("arbitrary",)),
        cost_estimate=pl.CostEstimate(
            flops=int(flops),
            transcendentals=int(b * n * n),
            bytes_accessed=int(bytes_accessed),
        ),
    )(q, kt)


# ----------------------------------------------------------------------------
# Kernel 2: fused gather + add + parameter-free layer_norm (eps = 1e-5).
# Flat subject/object row indices are scalar-prefetched into SMEM; rows of the
# VMEM-resident flattened q are gathered with dynamic pl.ds loads, summed into
# the output block, then layer-normed as one (B*Ki*Kr, D) slab.
# ----------------------------------------------------------------------------
def _gather_add_layernorm_kernel(subj_ref, obj_ref, q_ref, out_ref):
    n_rows = out_ref.shape[0]
    for r in range(n_rows):  # static, fully unrolled; dynamic sublane-offset loads
        s_row = q_ref[pl.ds(subj_ref[r], 1), :]      # (1, D)
        o_row = q_ref[pl.ds(obj_ref[r], 1), :]       # (1, D)
        out_ref[pl.ds(r, 1), :] = s_row + o_row

    x = out_ref[...]                                 # (R, D) f32
    mean = jnp.mean(x, axis=-1, keepdims=True)
    xc = x - mean
    var = jnp.mean(xc * xc, axis=-1, keepdims=True)
    out_ref[...] = (xc * jax.lax.rsqrt(var + 1e-5)).astype(out_ref.dtype)


def _relationship_embeds(q_flat, subj_flat, obj_flat):
    bn, d = q_flat.shape
    r = subj_flat.shape[0]
    grid_spec = pltpu.PrefetchScalarGridSpec(
        num_scalar_prefetch=2,
        grid=(1,),
        in_specs=[pl.BlockSpec((bn, d), lambda i, s, o: (0, 0))],
        out_specs=pl.BlockSpec((r, d), lambda i, s, o: (0, 0)),
    )
    return pl.pallas_call(
        _gather_add_layernorm_kernel,
        out_shape=jax.ShapeDtypeStruct((r, d), jnp.float32),
        grid_spec=grid_spec,
        compiler_params=pltpu.CompilerParams(dimension_semantics=("arbitrary",)),
        cost_estimate=pl.CostEstimate(
            flops=int(8 * r * d),
            transcendentals=int(r),
            bytes_accessed=int(4 * (bn * d + r * d) + 8 * r),
        ),
    )(subj_flat, obj_flat, q_flat)


# ----------------------------------------------------------------------------
# Full forward.  Hot paths (matmul + softmax-diag, gather + add + layernorm)
# run in Pallas; top-k / sort index bookkeeping is plain-JAX glue reproducing
# the torch topk -> masked_fill -> topk -> ordering exactly as in v1.
# ----------------------------------------------------------------------------
@functools.partial(jax.jit, static_argnames=("top_k_instances", "top_k_relationships"))
def relationship_attention(q, k, *, top_k_instances, top_k_relationships):
    b, n, d = q.shape
    ki, kr = top_k_instances, top_k_relationships

    # Feed the MXU a non-transposed RHS: pre-transpose k in the wrapper.
    kt = jnp.swapaxes(k, 1, 2)                                    # (B, D, N)

    # --- Pallas hot path #1: raw scores + diag(softmax). ---
    scores1, diag_out = _scores_and_diag(q, kt)
    diag_probs = diag_out.reshape(b, n)                           # free reshape

    # --- index-selection glue (torch.topk / sort / where equivalent) ---
    _, top_idx = jax.lax.top_k(diag_probs, ki)                    # (B, Ki)
    top_idx = jnp.sort(top_idx, axis=-1)                          # ascending

    gather_rows = jax.vmap(lambda arr, idx: arr[idx])
    score_rows = gather_rows(scores1, top_idx)                    # (B, Ki, N)
    prob_rows = jax.nn.softmax(score_rows, axis=-1)               # only Ki rows
    rel_scores = jax.vmap(lambda r_, c: r_[:, c])(prob_rows, top_idx)  # (B, Ki, Ki)
    eye = jnp.eye(ki, dtype=bool)
    rel_scores = jnp.where(eye[None], 1e9, rel_scores)            # masked_fill_ diag

    _, rel_col_idx = jax.lax.top_k(rel_scores, kr)                # (B, Ki, Kr)
    rel_col_idx = jnp.sort(rel_col_idx, axis=-1)                  # torch.where order

    subj_orig = jnp.broadcast_to(top_idx[:, :, None], (b, ki, kr)).reshape(b, ki * kr)
    obj_orig = jax.vmap(lambda t, c: t[c])(top_idx, rel_col_idx).reshape(b, ki * kr)
    batch_ids = jnp.broadcast_to(
        jnp.arange(b, dtype=top_idx.dtype)[:, None], (b, ki * kr)
    )
    subject_object_indices = jnp.stack([batch_ids, subj_orig, obj_orig], axis=-1)

    # Flat row indices into q.reshape(B*N, D) for the fused gather kernel.
    subj_flat = (batch_ids * n + subj_orig).reshape(-1).astype(jnp.int32)
    obj_flat = (batch_ids * n + obj_orig).reshape(-1).astype(jnp.int32)

    # --- Pallas hot path #2: fused gather + add + layer_norm. ---
    q_flat = q.reshape(b * n, d)                                  # free reshape
    rel_flat = _relationship_embeds(q_flat, subj_flat, obj_flat)  # (B*Ki*Kr, D)
    relationship_embeds = rel_flat.reshape(b, ki * kr, d)

    return scores1, subject_object_indices, relationship_embeds


if __name__ == "__main__":
    # Small shapes consistent with the module: dim=32, N=16 instances,
    # top_k_instances=8, top_k_relationships=4, batch=2.
    B, N, D = 2, 16, 32
    KI, KR = 8, 4

    key = jax.random.PRNGKey(0)
    kq, kk = jax.random.split(key)
    q = jax.random.normal(kq, (B, N, D), dtype=jnp.float32)
    k = jax.random.normal(kk, (B, N, D), dtype=jnp.float32)

    scores1, so_idx, rel_embeds = relationship_attention(
        q, k, top_k_instances=KI, top_k_relationships=KR
    )
    scores1, so_idx, rel_embeds = jax.block_until_ready((scores1, so_idx, rel_embeds))

    assert scores1.shape == (B, N, N)
    assert so_idx.shape == (B, KI * KR, 3)
    assert rel_embeds.shape == (B, KI * KR, D)
    print("KERNEL_OK")
</pallas_src>

<mosaic_0001>
module attributes {stable_mosaic.version = 11 : i64} {
  func.func @_scores_diag_kernel(%arg0: i32, %arg1: memref<2x16x32xf32, #tpu.memory_space<vmem>>, %arg2: memref<2x32x16xf32, #tpu.memory_space<vmem>>, %arg3: memref<2x16x16xf32, #tpu.memory_space<vmem>>, %arg4: memref<2x16x1xf32, #tpu.memory_space<vmem>>) attributes {dimension_semantics = [#tpu.dimension_semantics<arbitrary>], iteration_bounds = array<i64: 1>, scalar_prefetch = 0 : i64, scratch_operands = 0 : i64, tpu.core_type = #tpu.core_type<tc>, window_params = [{pipeline_mode = #tpu.pipeline_mode<synchronous>, transform_indices = @transform_0, window_bounds = array<i64: 2, 16, 32>}, {pipeline_mode = #tpu.pipeline_mode<synchronous>, transform_indices = @transform_1, window_bounds = array<i64: 2, 32, 16>}, {pipeline_mode = #tpu.pipeline_mode<synchronous>, transform_indices = @transform_2, window_bounds = array<i64: 2, 16, 16>}, {pipeline_mode = #tpu.pipeline_mode<synchronous>, transform_indices = @transform_3, window_bounds = array<i64: 2, 16, 1>}]} {
    %0 = tpu.iota {dimensions = array<i32: 0>} : vector<16x16xi32>
    %1 = tpu.iota {dimensions = array<i32: 1>} : vector<16x16xi32>
    %2 = arith.cmpi eq, %0, %1 : vector<16x16xi32>
    %c0 = arith.constant 0 : index
    %c0_0 = arith.constant 0 : index
    %c0_1 = arith.constant 0 : index
    %3 = vector.load %arg1[%c0, %c0_0, %c0_1] : memref<2x16x32xf32, #tpu.memory_space<vmem>>, vector<1x16x32xf32>
    %4 = vector.shape_cast %3 : vector<1x16x32xf32> to vector<16x32xf32>
    %c0_2 = arith.constant 0 : index
    %c0_3 = arith.constant 0 : index
    %c0_4 = arith.constant 0 : index
    %5 = vector.load %arg2[%c0_2, %c0_3, %c0_4] : memref<2x32x16xf32, #tpu.memory_space<vmem>>, vector<1x32x16xf32>
    %6 = vector.shape_cast %5 : vector<1x32x16xf32> to vector<32x16xf32>
    %cst = arith.constant dense<0.000000e+00> : vector<16x16xf32>
    %7 = tpu.matmul %4, %6, %cst {dimension_numbers = #tpu.dot_dimension_numbers<[1], [0], [0], [1], [0, 0, 1, 1], [], []>} : vector<16x32xf32>, vector<32x16xf32>, vector<16x16xf32> -> vector<16x16xf32>
    %c0_5 = arith.constant 0 : index
    %c0_6 = arith.constant 0 : index
    %c0_7 = arith.constant 0 : index
    %8 = vector.load %arg3[%c0_5, %c0_6, %c0_7] : memref<2x16x16xf32, #tpu.memory_space<vmem>>, vector<1x16x16xf32>
    %9 = vector.shape_cast %8 : vector<1x16x16xf32> to vector<16x16xf32>
    %10 = vector.shape_cast %7 : vector<16x16xf32> to vector<1x16x16xf32>
    tpu.vector_store %arg3[%c0_5, %c0_6, %c0_7], %10 {strides = array<i32>} : memref<2x16x16xf32, #tpu.memory_space<vmem>>, vector<1x16x16xf32>,
    %cst_8 = arith.constant dense<0xFF800000> : vector<16xf32>
    %11 = vector.multi_reduction <maximumf>, %7, %cst_8 [1] : vector<16x16xf32> to vector<16xf32>
    %12 = vector.shape_cast %11 : vector<16xf32> to vector<16x1xf32>
    %13 = vector.broadcast %12 : vector<16x1xf32> to vector<16x16xf32>
    %14 = arith.subf %7, %13 : vector<16x16xf32>
    %15 = math.exp %14 : vector<16x16xf32>
    %cst_9 = arith.constant dense<0.000000e+00> : vector<16xf32>
    %16 = vector.multi_reduction <add>, %15, %cst_9 [1] : vector<16x16xf32> to vector<16xf32>
    %17 = vector.shape_cast %16 : vector<16xf32> to vector<16x1xf32>
    %cst_10 = arith.constant 0.000000e+00 : f32
    %18 = vector.broadcast %cst_10 : f32 to vector<16x16xf32>
    %19 = arith.select %2, %15, %18 : vector<16x16xi1>, vector<16x16xf32>
    %cst_11 = arith.constant dense<0.000000e+00> : vector<16xf32>
    %20 = vector.multi_reduction <add>, %19, %cst_11 [1] : vector<16x16xf32> to vector<16xf32>
    %21 = vector.shape_cast %20 : vector<16xf32> to vector<16x1xf32>
    %22 = arith.divf %21, %17 : vector<16x1xf32>
    %c0_12 = arith.constant 0 : index
    %c0_13 = arith.constant 0 : index
    %c0_14 = arith.constant 0 : index
    %23 = vector.load %arg4[%c0_12, %c0_13, %c0_14] : memref<2x16x1xf32, #tpu.memory_space<vmem>>, vector<1x16x1xf32>
    %24 = vector.shape_cast %23 : vector<1x16x1xf32> to vector<16x1xf32>
    %25 = vector.shape_cast %22 : vector<16x1xf32> to vector<1x16x1xf32>
    tpu.vector_store %arg4[%c0_12, %c0_13, %c0_14], %25 {strides = array<i32>} : memref<2x16x1xf32, #tpu.memory_space<vmem>>, vector<1x16x1xf32>,
    %c1 = arith.constant 1 : index
    %c0_15 = arith.constant 0 : index
    %c0_16 = arith.constant 0 : index
    %26 = vector.load %arg1[%c1, %c0_15, %c0_16] : memref<2x16x32xf32, #tpu.memory_space<vmem>>, vector<1x16x32xf32>
    %27 = vector.shape_cast %26 : vector<1x16x32xf32> to vector<16x32xf32>
    %c1_17 = arith.constant 1 : index
    %c0_18 = arith.constant 0 : index
    %c0_19 = arith.constant 0 : index
    %28 = vector.load %arg2[%c1_17, %c0_18, %c0_19] : memref<2x32x16xf32, #tpu.memory_space<vmem>>, vector<1x32x16xf32>
    %29 = vector.shape_cast %28 : vector<1x32x16xf32> to vector<32x16xf32>
    %cst_20 = arith.constant dense<0.000000e+00> : vector<16x16xf32>
    %30 = tpu.matmul %27, %29, %cst_20 {dimension_numbers = #tpu.dot_dimension_numbers<[1], [0], [0], [1], [0, 0, 1, 1], [], []>} : vector<16x32xf32>, vector<32x16xf32>, vector<16x16xf32> -> vector<16x16xf32>
    %c1_21 = arith.constant 1 : index
    %c0_22 = arith.constant 0 : index
    %c0_23 = arith.constant 0 : index
    %31 = vector.load %arg3[%c1_21, %c0_22, %c0_23] : memref<2x16x16xf32, #tpu.memory_space<vmem>>, vector<1x16x16xf32>
    %32 = vector.shape_cast %31 : vector<1x16x16xf32> to vector<16x16xf32>
    %33 = vector.shape_cast %30 : vector<16x16xf32> to vector<1x16x16xf32>
    tpu.vector_store %arg3[%c1_21, %c0_22, %c0_23], %33 {strides = array<i32>} : memref<2x16x16xf32, #tpu.memory_space<vmem>>, vector<1x16x16xf32>,
    %cst_24 = arith.constant dense<0xFF800000> : vector<16xf32>
    %34 = vector.multi_reduction <maximumf>, %30, %cst_24 [1] : vector<16x16xf32> to vector<16xf32>
    %35 = vector.shape_cast %34 : vector<16xf32> to vector<16x1xf32>
    %36 = vector.broadcast %35 : vector<16x1xf32> to vector<16x16xf32>
    %37 = arith.subf %30, %36 : vector<16x16xf32>
    %38 = math.exp %37 : vector<16x16xf32>
    %cst_25 = arith.constant dense<0.000000e+00> : vector<16xf32>
    %39 = vector.multi_reduction <add>, %38, %cst_25 [1] : vector<16x16xf32> to vector<16xf32>
    %40 = vector.shape_cast %39 : vector<16xf32> to vector<16x1xf32>
    %cst_26 = arith.constant 0.000000e+00 : f32
    %41 = vector.broadcast %cst_26 : f32 to vector<16x16xf32>
    %42 = arith.select %2, %38, %41 : vector<16x16xi1>, vector<16x16xf32>
    %cst_27 = arith.constant dense<0.000000e+00> : vector<16xf32>
    %43 = vector.multi_reduction <add>, %42, %cst_27 [1] : vector<16x16xf32> to vector<16xf32>
    %44 = vector.shape_cast %43 : vector<16xf32> to vector<16x1xf32>
    %45 = arith.divf %44, %40 : vector<16x1xf32>
    %c1_28 = arith.constant 1 : index
    %c0_29 = arith.constant 0 : index
    %c0_30 = arith.constant 0 : index
    %46 = vector.load %arg4[%c1_28, %c0_29, %c0_30] : memref<2x16x1xf32, #tpu.memory_space<vmem>>, vector<1x16x1xf32>
    %47 = vector.shape_cast %46 : vector<1x16x1xf32> to vector<16x1xf32>
    %48 = vector.shape_cast %45 : vector<16x1xf32> to vector<1x16x1xf32>
    tpu.vector_store %arg4[%c1_28, %c0_29, %c0_30], %48 {strides = array<i32>} : memref<2x16x1xf32, #tpu.memory_space<vmem>>, vector<1x16x1xf32>,
    return
  }
  func.func @transform_0(%arg0: i32) -> (i32, i32, i32) {
    %c0_i32 = arith.constant 0 : i32
    %c0_i32_0 = arith.constant 0 : i32
    %c0_i32_1 = arith.constant 0 : i32
    %c0_i32_2 = arith.constant 0 : i32
    return %c0_i32, %c0_i32_0, %c0_i32_1 : i32, i32, i32
  }
  func.func @transform_1(%arg0: i32) -> (i32, i32, i32) {
    %c0_i32 = arith.constant 0 : i32
    %c0_i32_0 = arith.constant 0 : i32
    %c0_i32_1 = arith.constant 0 : i32
    %c0_i32_2 = arith.constant 0 : i32
    return %c0_i32, %c0_i32_0, %c0_i32_1 : i32, i32, i32
  }
  func.func @transform_2(%arg0: i32) -> (i32, i32, i32) {
    %c0_i32 = arith.constant 0 : i32
    %c0_i32_0 = arith.constant 0 : i32
    %c0_i32_1 = arith.constant 0 : i32
    %c0_i32_2 = arith.constant 0 : i32
    return %c0_i32, %c0_i32_0, %c0_i32_1 : i32, i32, i32
  }
  func.func @transform_3(%arg0: i32) -> (i32, i32, i32) {
    %c0_i32 = arith.constant 0 : i32
    %c0_i32_0 = arith.constant 0 : i32
    %c0_i32_1 = arith.constant 0 : i32
    %c0_i32_2 = arith.constant 0 : i32
    return %c0_i32, %c0_i32_0, %c0_i32_1 : i32, i32, i32
  }
}

module attributes {stable_mosaic.version = 11 : i64} {
  func.func @_gather_add_layernorm_kernel(%arg0: i32, %arg1: memref<64xi32, #tpu.memory_space<smem>>, %arg2: memref<64xi32, #tpu.memory_space<smem>>, %arg3: memref<32x32xf32, #tpu.memory_space<vmem>>, %arg4: memref<64x32xf32, #tpu.memory_space<vmem>>) attributes {dimension_semantics = [#tpu.dimension_semantics<arbitrary>], iteration_bounds = array<i64: 1>, scalar_prefetch = 2 : i64, scratch_operands = 0 : i64, tpu.core_type = #tpu.core_type<tc>, window_params = [{pipeline_mode = #tpu.pipeline_mode<synchronous>, transform_indices = @transform_0, window_bounds = array<i64: 32, 32>}, {pipeline_mode = #tpu.pipeline_mode<synchronous>, transform_indices = @transform_1, window_bounds = array<i64: 64, 32>}]} {
    %c0 = arith.constant 0 : index
    %0 = memref.load %arg1[%c0] : memref<64xi32, #tpu.memory_space<smem>>
    %1 = arith.index_cast %0 : i32 to index
    %c0_0 = arith.constant 0 : index
    %2 = vector.load %arg3[%1, %c0_0] : memref<32x32xf32, #tpu.memory_space<vmem>>, vector<1x32xf32>
    %c0_1 = arith.constant 0 : index
    %3 = memref.load %arg2[%c0_1] : memref<64xi32, #tpu.memory_space<smem>>
    %4 = arith.index_cast %3 : i32 to index
    %c0_2 = arith.constant 0 : index
    %5 = vector.load %arg3[%4, %c0_2] : memref<32x32xf32, #tpu.memory_space<vmem>>, vector<1x32xf32>
    %6 = arith.addf %2, %5 : vector<1x32xf32>
    %c0_3 = arith.constant 0 : index
    %c0_4 = arith.constant 0 : index
    %7 = vector.load %arg4[%c0_3, %c0_4] : memref<64x32xf32, #tpu.memory_space<vmem>>, vector<1x32xf32>
    tpu.vector_store %arg4[%c0_3, %c0_4], %6 {strides = array<i32>} : memref<64x32xf32, #tpu.memory_space<vmem>>, vector<1x32xf32>,
    %c1 = arith.constant 1 : index
    %8 = memref.load %arg1[%c1] : memref<64xi32, #tpu.memory_space<smem>>
    %9 = arith.index_cast %8 : i32 to index
    %c0_5 = arith.constant 0 : index
    %10 = vector.load %arg3[%9, %c0_5] : memref<32x32xf32, #tpu.memory_space<vmem>>, vector<1x32xf32>
    %c1_6 = arith.constant 1 : index
    %11 = memref.load %arg2[%c1_6] : memref<64xi32, #tpu.memory_space<smem>>
    %12 = arith.index_cast %11 : i32 to index
    %c0_7 = arith.constant 0 : index
    %13 = vector.load %arg3[%12, %c0_7] : memref<32x32xf32, #tpu.memory_space<vmem>>, vector<1x32xf32>
    %14 = arith.addf %10, %13 : vector<1x32xf32>
    %c1_8 = arith.constant 1 : index
    %c0_9 = arith.constant 0 : index
    %15 = vector.load %arg4[%c1_8, %c0_9] : memref<64x32xf32, #tpu.memory_space<vmem>>, vector<1x32xf32>
    tpu.vector_store %arg4[%c1_8, %c0_9], %14 {strides = array<i32>} : memref<64x32xf32, #tpu.memory_space<vmem>>, vector<1x32xf32>,
    %c2 = arith.constant 2 : index
    %16 = memref.load %arg1[%c2] : memref<64xi32, #tpu.memory_space<smem>>
    %17 = arith.index_cast %16 : i32 to index
    %c0_10 = arith.constant 0 : index
    %18 = vector.load %arg3[%17, %c0_10] : memref<32x32xf32, #tpu.memory_space<vmem>>, vector<1x32xf32>
    %c2_11 = arith.constant 2 : index
    %19 = memref.load %arg2[%c2_11] : memref<64xi32, #tpu.memory_space<smem>>
    %20 = arith.index_cast %19 : i32 to index
    %c0_12 = arith.constant 0 : index
    %21 = vector.load %arg3[%20, %c0_12] : memref<32x32xf32, #tpu.memory_space<vmem>>, vector<1x32xf32>
    %22 = arith.addf %18, %21 : vector<1x32xf32>
    %c2_13 = arith.constant 2 : index
    %c0_14 = arith.constant 0 : index
    %23 = vector.load %arg4[%c2_13, %c0_14] : memref<64x32xf32, #tpu.memory_space<vmem>>, vector<1x32xf32>
    tpu.vector_store %arg4[%c2_13, %c0_14], %22 {strides = array<i32>} : memref<64x32xf32, #tpu.memory_space<vmem>>, vector<1x32xf32>,
    %c3 = arith.constant 3 : index
    %24 = memref.load %arg1[%c3] : memref<64xi32, #tpu.memory_space<smem>>
    %25 = arith.index_cast %24 : i32 to index
    %c0_15 = arith.constant 0 : index
    %26 = vector.load %arg3[%25, %c0_15] : memref<32x32xf32, #tpu.memory_space<vmem>>, vector<1x32xf32>
    %c3_16 = arith.constant 3 : index
    %27 = memref.load %arg2[%c3_16] : memref<64xi32, #tpu.memory_space<smem>>
    %28 = arith.index_cast %27 : i32 to index
    %c0_17 = arith.constant 0 : index
    %29 = vector.load %arg3[%28, %c0_17] : memref<32x32xf32, #tpu.memory_space<vmem>>, vector<1x32xf32>
    %30 = arith.addf %26, %29 : vector<1x32xf32>
    %c3_18 = arith.constant 3 : index
    %c0_19 = arith.constant 0 : index
    %31 = vector.load %arg4[%c3_18, %c0_19] : memref<64x32xf32, #tpu.memory_space<vmem>>, vector<1x32xf32>
    tpu.vector_store %arg4[%c3_18, %c0_19], %30 {strides = array<i32>} : memref<64x32xf32, #tpu.memory_space<vmem>>, vector<1x32xf32>,
    %c4 = arith.constant 4 : index
    %32 = memref.load %arg1[%c4] : memref<64xi32, #tpu.memory_space<smem>>
    %33 = arith.index_cast %32 : i32 to index
    %c0_20 = arith.constant 0 : index
    %34 = vector.load %arg3[%33, %c0_20] : memref<32x32xf32, #tpu.memory_space<vmem>>, vector<1x32xf32>
    %c4_21 = arith.constant 4 : index
    %35 = memref.load %arg2[%c4_21] : memref<64xi32, #tpu.memory_space<smem>>
    %36 = arith.index_cast %35 : i32 to index
    %c0_22 = arith.constant 0 : index
    %37 = vector.load %arg3[%36, %c0_22] : memref<32x32xf32, #tpu.memory_space<vmem>>, vector<1x32xf32>
    %38 = arith.addf %34, %37 : vector<1x32xf32>
    %c4_23 = arith.constant 4 : index
    %c0_24 = arith.constant 0 : index
    %39 = vector.load %arg4[%c4_23, %c0_24] : memref<64x32xf32, #tpu.memory_space<vmem>>, vector<1x32xf32>
    tpu.vector_store %arg4[%c4_23, %c0_24], %38 {strides = array<i32>} : memref<64x32xf32, #tpu.memory_space<vmem>>, vector<1x32xf32>,
    %c5 = arith.constant 5 : index
    %40 = memref.load %arg1[%c5] : memref<64xi32, #tpu.memory_space<smem>>
    %41 = arith.index_cast %40 : i32 to index
    %c0_25 = arith.constant 0 : index
    %42 = vector.load %arg3[%41, %c0_25] : memref<32x32xf32, #tpu.memory_space<vmem>>, vector<1x32xf32>
    %c5_26 = arith.constant 5 : index
    %43 = memref.load %arg2[%c5_26] : memref<64xi32, #tpu.memory_space<smem>>
    %44 = arith.index_cast %43 : i32 to index
    %c0_27 = arith.constant 0 : index
    %45 = vector.load %arg3[%44, %c0_27] : memref<32x32xf32, #tpu.memory_space<vmem>>, vector<1x32xf32>
    %46 = arith.addf %42, %45 : vector<1x32xf32>
    %c5_28 = arith.constant 5 : index
    %c0_29 = arith.constant 0 : index
    %47 = vector.load %arg4[%c5_28, %c0_29] : memref<64x32xf32, #tpu.memory_space<vmem>>, vector<1x32xf32>
    tpu.vector_store %arg4[%c5_28, %c0_29], %46 {strides = array<i32>} : memref<64x32xf32, #tpu.memory_space<vmem>>, vector<1x32xf32>,
    %c6 = arith.constant 6 : index
    %48 = memref.load %arg1[%c6] : memref<64xi32, #tpu.memory_space<smem>>
    %49 = arith.index_cast %48 : i32 to index
    %c0_30 = arith.constant 0 : index
    %50 = vector.load %arg3[%49, %c0_30] : memref<32x32xf32, #tpu.memory_space<vmem>>, vector<1x32xf32>
    %c6_31 = arith.constant 6 : index
    %51 = memref.load %arg2[%c6_31] : memref<64xi32, #tpu.memory_space<smem>>
    %52 = arith.index_cast %51 : i32 to index
    %c0_32 = arith.constant 0 : index
    %53 = vector.load %arg3[%52, %c0_32] : memref<32x32xf32, #tpu.memory_space<vmem>>, vector<1x32xf32>
    %54 = arith.addf %50, %53 : vector<1x32xf32>
    %c6_33 = arith.constant 6 : index
    %c0_34 = arith.constant 0 : index
    %55 = vector.load %arg4[%c6_33, %c0_34] : memref<64x32xf32, #tpu.memory_space<vmem>>, vector<1x32xf32>
    tpu.vector_store %arg4[%c6_33, %c0_34], %54 {strides = array<i32>} : memref<64x32xf32, #tpu.memory_space<vmem>>, vector<1x32xf32>,
    %c7 = arith.constant 7 : index
    %56 = memref.load %arg1[%c7] : memref<64xi32, #tpu.memory_space<smem>>
    %57 = arith.index_cast %56 : i32 to index
    %c0_35 = arith.constant 0 : index
    %58 = vector.load %arg3[%57, %c0_35] : memref<32x32xf32, #tpu.memory_space<vmem>>, vector<1x32xf32>
    %c7_36 = arith.constant 7 : index
    %59 = memref.load %arg2[%c7_36] : memref<64xi32, #tpu.memory_space<smem>>
    %60 = arith.index_cast %59 : i32 to index
    %c0_37 = arith.constant 0 : index
    %61 = vector.load %arg3[%60, %c0_37] : memref<32x32xf32, #tpu.memory_space<vmem>>, vector<1x32xf32>
    %62 = arith.addf %58, %61 : vector<1x32xf32>
    %c7_38 = arith.constant 7 : index
    %c0_39 = arith.constant 0 : index
    %63 = vector.load %arg4[%c7_38, %c0_39] : memref<64x32xf32, #tpu.memory_space<vmem>>, vector<1x32xf32>
    tpu.vector_store %arg4[%c7_38, %c0_39], %62 {strides = array<i32>} : memref<64x32xf32, #tpu.memory_space<vmem>>, vector<1x32xf32>,
    %c8 = arith.constant 8 : index
    %64 = memref.load %arg1[%c8] : memref<64xi32, #tpu.memory_space<smem>>
    %65 = arith.index_cast %64 : i32 to index
    %c0_40 = arith.constant 0 : index
    %66 = vector.load %arg3[%65, %c0_40] : memref<32x32xf32, #tpu.memory_space<vmem>>, vector<1x32xf32>
    %c8_41 = arith.constant 8 : index
    %67 = memref.load %arg2[%c8_41] : memref<64xi32, #tpu.memory_space<smem>>
    %68 = arith.index_cast %67 : i32 to index
    %c0_42 = arith.constant 0 : index
    %69 = vector.load %arg3[%68, %c0_42] : memref<32x32xf32, #tpu.memory_space<vmem>>, vector<1x32xf32>
    %70 = arith.addf %66, %69 : vector<1x32xf32>
    %c8_43 = arith.constant 8 : index
    %c0_44 = arith.constant 0 : index
    %71 = vector.load %arg4[%c8_43, %c0_44] : memref<64x32xf32, #tpu.memory_space<vmem>>, vector<1x32xf32>
    tpu.vector_store %arg4[%c8_43, %c0_44], %70 {strides = array<i32>} : memref<64x32xf32, #tpu.memory_space<vmem>>, vector<1x32xf32>,
    %c9 = arith.constant 9 : index
    %72 = memref.load %arg1[%c9] : memref<64xi32, #tpu.memory_space<smem>>
    %73 = arith.index_cast %72 : i32 to index
    %c0_45 = arith.constant 0 : index
    %74 = vector.load %arg3[%73, %c0_45] : memref<32x32xf32, #tpu.memory_space<vmem>>, vector<1x32xf32>
    %c9_46 = arith.constant 9 : index
    %75 = memref.load %arg2[%c9_46] : memref<64xi32, #tpu.memory_space<smem>>
    %76 = arith.index_cast %75 : i32 to index
    %c0_47 = arith.constant 0 : index
    %77 = vector.load %arg3[%76, %c0_47] : memref<32x32xf32, #tpu.memory_space<vmem>>, vector<1x32xf32>
    %78 = arith.addf %74, %77 : vector<1x32xf32>
    %c9_48 = arith.constant 9 : index
    %c0_49 = arith.constant 0 : index
    %79 = vector.load %arg4[%c9_48, %c0_49] : memref<64x32xf32, #tpu.memory_space<vmem>>, vector<1x32xf32>
    tpu.vector_store %arg4[%c9_48, %c0_49], %78 {strides = array<i32>} : memref<64x32xf32, #tpu.memory_space<vmem>>, vector<1x32xf32>,
    %c10 = arith.constant 10 : index
    %80 = memref.load %arg1[%c10] : memref<64xi32, #tpu.memory_space<smem>>
    %81 = arith.index_cast %80 : i32 to index
    %c0_50 = arith.constant 0 : index
    %82 = vector.load %arg3[%81, %c0_50] : memref<32x32xf32, #tpu.memory_space<vmem>>, vector<1x32xf32>
    %c10_51 = arith.constant 10 : index
    %83 = memref.load %arg2[%c10_51] : memref<64xi32, #tpu.memory_space<smem>>
    %84 = arith.index_cast %83 : i32 to index
    %c0_52 = arith.constant 0 : index
    %85 = vector.load %arg3[%84, %c0_52] : memref<32x32xf32, #tpu.memory_space<vmem>>, vector<1x32xf32>
    %86 = arith.addf %82, %85 : vector<1x32xf32>
    %c10_53 = arith.constant 10 : index
    %c0_54 = arith.constant 0 : index
    %87 = vector.load %arg4[%c10_53, %c0_54] : memref<64x32xf32, #tpu.memory_space<vmem>>, vector<1x32xf32>
    tpu.vector_store %arg4[%c10_53, %c0_54], %86 {strides = array<i32>} : memref<64x32xf32, #tpu.memory_space<vmem>>, vector<1x32xf32>,
    %c11 = arith.constant 11 : index
    %88 = memref.load %arg1[%c11] : memref<64xi32, #tpu.memory_space<smem>>
    %89 = arith.index_cast %88 : i32 to index
    %c0_55 = arith.constant 0 : index
    %90 = vector.load %arg3[%89, %c0_55] : memref<32x32xf32, #tpu.memory_space<vmem>>, vector<1x32xf32>
    %c11_56 = arith.constant 11 : index
    %91 = memref.load %arg2[%c11_56] : memref<64xi32, #tpu.memory_space<smem>>
    %92 = arith.index_cast %91 : i32 to index
    %c0_57 = arith.constant 0 : index
    %93 = vector.load %arg3[%92, %c0_57] : memref<32x32xf32, #tpu.memory_space<vmem>>, vector<1x32xf32>
    %94 = arith.addf %90, %93 : vector<1x32xf32>
    %c11_58 = arith.constant 11 : index
    %c0_59 = arith.constant 0 : index
    %95 = vector.load %arg4[%c11_58, %c0_59] : memref<64x32xf32, #tpu.memory_space<vmem>>, vector<1x32xf32>
    tpu.vector_store %arg4[%c11_58, %c0_59], %94 {strides = array<i32>} : memref<64x32xf32, #tpu.memory_space<vmem>>, vector<1x32xf32>,
    %c12 = arith.constant 12 : index
    %96 = memref.load %arg1[%c12] : memref<64xi32, #tpu.memory_space<smem>>
    %97 = arith.index_cast %96 : i32 to index
    %c0_60 = arith.constant 0 : index
    %98 = vector.load %arg3[%97, %c0_60] : memref<32x32xf32, #tpu.memory_space<vmem>>, vector<1x32xf32>
    %c12_61 = arith.constant 12 : index
    %99 = memref.load %arg2[%c12_61] : memref<64xi32, #tpu.memory_space<smem>>
    %100 = arith.index_cast %99 : i32 to index
    %c0_62 = arith.constant 0 : index
    %101 = vector.load %arg3[%100, %c0_62] : memref<32x32xf32, #tpu.memory_space<vmem>>, vector<1x32xf32>
    %102 = arith.addf %98, %101 : vector<1x32xf32>
    %c12_63 = arith.constant 12 : index
    %c0_64 = arith.constant 0 : index
    %103 = vector.load %arg4[%c12_63, %c0_64] : memref<64x32xf32, #tpu.memory_space<vmem>>, vector<1x32xf32>
    tpu.vector_store %arg4[%c12_63, %c0_64], %102 {strides = array<i32>} : memref<64x32xf32, #tpu.memory_space<vmem>>, vector<1x32xf32>,
    %c13 = arith.constant 13 : index
    %104 = memref.load %arg1[%c13] : memref<64xi32, #tpu.memory_space<smem>>
    %105 = arith.index_cast %104 : i32 to index
    %c0_65 = arith.constant 0 : index
    %106 = vector.load %arg3[%105, %c0_65] : memref<32x32xf32, #tpu.memory_space<vmem>>, vector<1x32xf32>
    %c13_66 = arith.constant 13 : index
    %107 = memref.load %arg2[%c13_66] : memref<64xi32, #tpu.memory_space<smem>>
    %108 = arith.index_cast %107 : i32 to index
    %c0_67 = arith.constant 0 : index
    %109 = vector.load %arg3[%108, %c0_67] : memref<32x32xf32, #tpu.memory_space<vmem>>, vector<1x32xf32>
    %110 = arith.addf %106, %109 : vector<1x32xf32>
    %c13_68 = arith.constant 13 : index
    %c0_69 = arith.constant 0 : index
    %111 = vector.load %arg4[%c13_68, %c0_69] : memref<64x32xf32, #tpu.memory_space<vmem>>, vector<1x32xf32>
    tpu.vector_store %arg4[%c13_68, %c0_69], %110 {strides = array<i32>} : memref<64x32xf32, #tpu.memory_space<vmem>>, vector<1x32xf32>,
    %c14 = arith.constant 14 : index
    %112 = memref.load %arg1[%c14] : memref<64xi32, #tpu.memory_space<smem>>
    %113 = arith.index_cast %112 : i32 to index
    %c0_70 = arith.constant 0 : index
    %114 = vector.load %arg3[%113, %c0_70] : memref<32x32xf32, #tpu.memory_space<vmem>>, vector<1x32xf32>
    %c14_71 = arith.constant 14 : index
    %115 = memref.load %arg2[%c14_71] : memref<64xi32, #tpu.memory_space<smem>>
    %116 = arith.index_cast %115 : i32 to index
    %c0_72 = arith.constant 0 : index
    %117 = vector.load %arg3[%116, %c0_72] : memref<32x32xf32, #tpu.memory_space<vmem>>, vector<1x32xf32>
    %118 = arith.addf %114, %117 : vector<1x32xf32>
    %c14_73 = arith.constant 14 : index
    %c0_74 = arith.constant 0 : index
    %119 = vector.load %arg4[%c14_73, %c0_74] : memref<64x32xf32, #tpu.memory_space<vmem>>, vector<1x32xf32>
    tpu.vector_store %arg4[%c14_73, %c0_74], %118 {strides = array<i32>} : memref<64x32xf32, #tpu.memory_space<vmem>>, vector<1x32xf32>,
    %c15 = arith.constant 15 : index
    %120 = memref.load %arg1[%c15] : memref<64xi32, #tpu.memory_space<smem>>
    %121 = arith.index_cast %120 : i32 to index
    %c0_75 = arith.constant 0 : index
    %122 = vector.load %arg3[%121, %c0_75] : memref<32x32xf32, #tpu.memory_space<vmem>>, vector<1x32xf32>
    %c15_76 = arith.constant 15 : index
    %123 = memref.load %arg2[%c15_76] : memref<64xi32, #tpu.memory_space<smem>>
    %124 = arith.index_cast %123 : i32 to index
    %c0_77 = arith.constant 0 : index
    %125 = vector.load %arg3[%124, %c0_77] : memref<32x32xf32, #tpu.memory_space<vmem>>, vector<1x32xf32>
    %126 = arith.addf %122, %125 : vector<1x32xf32>
    %c15_78 = arith.constant 15 : index
    %c0_79 = arith.constant 0 : index
    %127 = vector.load %arg4[%c15_78, %c0_79] : memref<64x32xf32, #tpu.memory_space<vmem>>, vector<1x32xf32>
    tpu.vector_store %arg4[%c15_78, %c0_79], %126 {strides = array<i32>} : memref<64x32xf32, #tpu.memory_space<vmem>>, vector<1x32xf32>,
    %c16 = arith.constant 16 : index
    %128 = memref.load %arg1[%c16] : memref<64xi32, #tpu.memory_space<smem>>
    %129 = arith.index_cast %128 : i32 to index
    %c0_80 = arith.constant 0 : index
    %130 = vector.load %arg3[%129, %c0_80] : memref<32x32xf32, #tpu.memory_space<vmem>>, vector<1x32xf32>
    %c16_81 = arith.constant 16 : index
    %131 = memref.load %arg2[%c16_81] : memref<64xi32, #tpu.memory_space<smem>>
    %132 = arith.index_cast %131 : i32 to index
    %c0_82 = arith.constant 0 : index
    %133 = vector.load %arg3[%132, %c0_82] : memref<32x32xf32, #tpu.memory_space<vmem>>, vector<1x32xf32>
    %134 = arith.addf %130, %133 : vector<1x32xf32>
    %c16_83 = arith.constant 16 : index
    %c0_84 = arith.constant 0 : index
    %135 = vector.load %arg4[%c16_83, %c0_84] : memref<64x32xf32, #tpu.memory_space<vmem>>, vector<1x32xf32>
    tpu.vector_store %arg4[%c16_83, %c0_84], %134 {strides = array<i32>} : memref<64x32xf32, #tpu.memory_space<vmem>>, vector<1x32xf32>,
    %c17 = arith.constant 17 : index
    %136 = memref.load %arg1[%c17] : memref<64xi32, #tpu.memory_space<smem>>
    %137 = arith.index_cast %136 : i32 to index
    %c0_85 = arith.constant 0 : index
    %138 = vector.load %arg3[%137, %c0_85] : memref<32x32xf32, #tpu.memory_space<vmem>>, vector<1x32xf32>
    %c17_86 = arith.constant 17 : index
    %139 = memref.load %arg2[%c17_86] : memref<64xi32, #tpu.memory_space<smem>>
    %140 = arith.index_cast %139 : i32 to index
    %c0_87 = arith.constant 0 : index
    %141 = vector.load %arg3[%140, %c0_87] : memref<32x32xf32, #tpu.memory_space<vmem>>, vector<1x32xf32>
    %142 = arith.addf %138, %141 : vector<1x32xf32>
    %c17_88 = arith.constant 17 : index
    %c0_89 = arith.constant 0 : index
    %143 = vector.load %arg4[%c17_88, %c0_89] : memref<64x32xf32, #tpu.memory_space<vmem>>, vector<1x32xf32>
    tpu.vector_store %arg4[%c17_88, %c0_89], %142 {strides = array<i32>} : memref<64x32xf32, #tpu.memory_space<vmem>>, vector<1x32xf32>,
    %c18 = arith.constant 18 : index
    %144 = memref.load %arg1[%c18] : memref<64xi32, #tpu.memory_space<smem>>
    %145 = arith.index_cast %144 : i32 to index
    %c0_90 = arith.constant 0 : index
    %146 = vector.load %arg3[%145, %c0_90] : memref<32x32xf32, #tpu.memory_space<vmem>>, vector<1x32xf32>
    %c18_91 = arith.constant 18 : index
    %147 = memref.load %arg2[%c18_91] : memref<64xi32, #tpu.memory_space<smem>>
    %148 = arith.index_cast %147 : i32 to index
    %c0_92 = arith.constant 0 : index
    %149 = vector.load %arg3[%148, %c0_92] : memref<32x32xf32, #tpu.memory_space<vmem>>, vector<1x32xf32>
    %150 = arith.addf %146, %149 : vector<1x32xf32>
    %c18_93 = arith.constant 18 : index
    %c0_94 = arith.constant 0 : index
    %151 = vector.load %arg4[%c18_93, %c0_94] : memref<64x32xf32, #tpu.memory_space<vmem>>, vector<1x32xf32>
    tpu.vector_store %arg4[%c18_93, %c0_94], %150 {strides = array<i32>} : memref<64x32xf32, #tpu.memory_space<vmem>>, vector<1x32xf32>,
    %c19 = arith.constant 19 : index
    %152 = memref.load %arg1[%c19] : memref<64xi32, #tpu.memory_space<smem>>
    %153 = arith.index_cast %152 : i32 to index
    %c0_95 = arith.constant 0 : index
    %154 = vector.load %arg3[%153, %c0_95] : memref<32x32xf32, #tpu.memory_space<vmem>>, vector<1x32xf32>
    %c19_96 = arith.constant 19 : index
    %155 = memref.load %arg2[%c19_96] : memref<64xi32, #tpu.memory_space<smem>>
    %156 = arith.index_cast %155 : i32 to index
    %c0_97 = arith.constant 0 : index
    %157 = vector.load %arg3[%156, %c0_97] : memref<32x32xf32, #tpu.memory_space<vmem>>, vector<1x32xf32>
    %158 = arith.addf %154, %157 : vector<1x32xf32>
    %c19_98 = arith.constant 19 : index
    %c0_99 = arith.constant 0 : index
    %159 = vector.load %arg4[%c19_98, %c0_99] : memref<64x32xf32, #tpu.memory_space<vmem>>, vector<1x32xf32>
    tpu.vector_store %arg4[%c19_98, %c0_99], %158 {strides = array<i32>} : memref<64x32xf32, #tpu.memory_space<vmem>>, vector<1x32xf32>,
    %c20 = arith.constant 20 : index
    %160 = memref.load %arg1[%c20] : memref<64xi32, #tpu.memory_space<smem>>
    %161 = arith.index_cast %160 : i32 to index
    %c0_100 = arith.constant 0 : index
    %162 = vector.load %arg3[%161, %c0_100] : memref<32x32xf32, #tpu.memory_space<vmem>>, vector<1x32xf32>
    %c20_101 = arith.constant 20 : index
    %163 = memref.load %arg2[%c20_101] : memref<64xi32, #tpu.memory_space<smem>>
    %164 = arith.index_cast %163 : i32 to index
    %c0_102 = arith.constant 0 : index
    %165 = vector.load %arg3[%164, %c0_102] : memref<32x32xf32, #tpu.memory_space<vmem>>, vector<1x32xf32>
    %166 = arith.addf %162, %165 : vector<1x32xf32>
    %c20_103 = arith.constant 20 : index
    %c0_104 = arith.constant 0 : index
    %167 = vector.load %arg4[%c20_103, %c0_104] : memref<64x32xf32, #tpu.memory_space<vmem>>, vector<1x32xf32>
    tpu.vector_store %arg4[%c20_103, %c0_104], %166 {strides = array<i32>} : memref<64x32xf32, #tpu.memory_space<vmem>>, vector<1x32xf32>,
    %c21 = arith.constant 21 : index
    %168 = memref.load %arg1[%c21] : memref<64xi32, #tpu.memory_space<smem>>
    %169 = arith.index_cast %168 : i32 to index
    %c0_105 = arith.constant 0 : index
    %170 = vector.load %arg3[%169, %c0_105] : memref<32x32xf32, #tpu.memory_space<vmem>>, vector<1x32xf32>
    %c21_106 = arith.constant 21 : index
    %171 = memref.load %arg2[%c21_106] : memref<64xi32, #tpu.memory_space<smem>>
    %172 = arith.index_cast %171 : i32 to index
    %c0_107 = arith.constant 0 : index
    %173 = vector.load %arg3[%172, %c0_107] : memref<32x32xf32, #tpu.memory_space<vmem>>, vector<1x32xf32>
    %174 = arith.addf %170, %173 : vector<1x32xf32>
    %c21_108 = arith.constant 21 : index
    %c0_109 = arith.constant 0 : index
    %175 = vector.load %arg4[%c21_108, %c0_109] : memref<64x32xf32, #tpu.memory_space<vmem>>, vector<1x32xf32>
    tpu.vector_store %arg4[%c21_108, %c0_109], %174 {strides = array<i32>} : memref<64x32xf32, #tpu.memory_space<vmem>>, vector<1x32xf32>,
    %c22 = arith.constant 22 : index
    %176 = memref.load %arg1[%c22] : memref<64xi32, #tpu.memory_space<smem>>
    %177 = arith.index_cast %176 : i32 to index
    %c0_110 = arith.constant 0 : index
    %178 = vector.load %arg3[%177, %c0_110] : memref<32x32xf32, #tpu.memory_space<vmem>>, vector<1x32xf32>
    %c22_111 = arith.constant 22 : index
    %179 = memref.load %arg2[%c22_111] : memref<64xi32, #tpu.memory_space<smem>>
    %180 = arith.index_cast %179 : i32 to index
    %c0_112 = arith.constant 0 : index
    %181 = vector.load %arg3[%180, %c0_112] : memref<32x32xf32, #tpu.memory_space<vmem>>, vector<1x32xf32>
    %182 = arith.addf %178, %181 : vector<1x32xf32>
    %c22_113 = arith.constant 22 : index
    %c0_114 = arith.constant 0 : index
    %183 = vector.load %arg4[%c22_113, %c0_114] : memref<64x32xf32, #tpu.memory_space<vmem>>, vector<1x32xf32>
    tpu.vector_store %arg4[%c22_113, %c0_114], %182 {strides = array<i32>} : memref<64x32xf32, #tpu.memory_space<vmem>>, vector<1x32xf32>,
    %c23 = arith.constant 23 : index
    %184 = memref.load %arg1[%c23] : memref<64xi32, #tpu.memory_space<smem>>
    %185 = arith.index_cast %184 : i32 to index
    %c0_115 = arith.constant 0 : index
    %186 = vector.load %arg3[%185, %c0_115] : memref<32x32xf32, #tpu.memory_space<vmem>>, vector<1x32xf32>
    %c23_116 = arith.constant 23 : index
    %187 = memref.load %arg2[%c23_116] : memref<64xi32, #tpu.memory_space<smem>>
    %188 = arith.index_cast %187 : i32 to index
    %c0_117 = arith.constant 0 : index
    %189 = vector.load %arg3[%188, %c0_117] : memref<32x32xf32, #tpu.memory_space<vmem>>, vector<1x32xf32>
    %190 = arith.addf %186, %189 : vector<1x32xf32>
    %c23_118 = arith.constant 23 : index
    %c0_119 = arith.constant 0 : index
    %191 = vector.load %arg4[%c23_118, %c0_119] : memref<64x32xf32, #tpu.memory_space<vmem>>, vector<1x32xf32>
    tpu.vector_store %arg4[%c23_118, %c0_119], %190 {strides = array<i32>} : memref<64x32xf32, #tpu.memory_space<vmem>>, vector<1x32xf32>,
    %c24 = arith.constant 24 : index
    %192 = memref.load %arg1[%c24] : memref<64xi32, #tpu.memory_space<smem>>
    %193 = arith.index_cast %192 : i32 to index
    %c0_120 = arith.constant 0 : index
    %194 = vector.load %arg3[%193, %c0_120] : memref<32x32xf32, #tpu.memory_space<vmem>>, vector<1x32xf32>
    %c24_121 = arith.constant 24 : index
    %195 = memref.load %arg2[%c24_121] : memref<64xi32, #tpu.memory_space<smem>>
    %196 = arith.index_cast %195 : i32 to index
    %c0_122 = arith.constant 0 : index
    %197 = vector.load %arg3[%196, %c0_122] : memref<32x32xf32, #tpu.memory_space<vmem>>, vector<1x32xf32>
    %198 = arith.addf %194, %197 : vector<1x32xf32>
    %c24_123 = arith.constant 24 : index
    %c0_124 = arith.constant 0 : index
    %199 = vector.load %arg4[%c24_123, %c0_124] : memref<64x32xf32, #tpu.memory_space<vmem>>, vector<1x32xf32>
    tpu.vector_store %arg4[%c24_123, %c0_124], %198 {strides = array<i32>} : memref<64x32xf32, #tpu.memory_space<vmem>>, vector<1x32xf32>,
    %c25 = arith.constant 25 : index
    %200 = memref.load %arg1[%c25] : memref<64xi32, #tpu.memory_space<smem>>
    %201 = arith.index_cast %200 : i32 to index
    %c0_125 = arith.constant 0 : index
    %202 = vector.load %arg3[%201, %c0_125] : memref<32x32xf32, #tpu.memory_space<vmem>>, vector<1x32xf32>
    %c25_126 = arith.constant 25 : index
    %203 = memref.load %arg2[%c25_126] : memref<64xi32, #tpu.memory_space<smem>>
    %204 = arith.index_cast %203 : i32 to index
    %c0_127 = arith.constant 0 : index
    %205 = vector.load %arg3[%204, %c0_127] : memref<32x32xf32, #tpu.memory_space<vmem>>, vector<1x32xf32>
    %206 = arith.addf %202, %205 : vector<1x32xf32>
    %c25_128 = arith.constant 25 : index
    %c0_129 = arith.constant 0 : index
    %207 = vector.load %arg4[%c25_128, %c0_129] : memref<64x32xf32, #tpu.memory_space<vmem>>, vector<1x32xf32>
    tpu.vector_store %arg4[%c25_128, %c0_129], %206 {strides = array<i32>} : memref<64x32xf32, #tpu.memory_space<vmem>>, vector<1x32xf32>,
    %c26 = arith.constant 26 : index
    %208 = memref.load %arg1[%c26] : memref<64xi32, #tpu.memory_space<smem>>
    %209 = arith.index_cast %208 : i32 to index
    %c0_130 = arith.constant 0 : index
    %210 = vector.load %arg3[%209, %c0_130] : memref<32x32xf32, #tpu.memory_space<vmem>>, vector<1x32xf32>
    %c26_131 = arith.constant 26 : index
    %211 = memref.load %arg2[%c26_131] : memref<64xi32, #tpu.memory_space<smem>>
    %212 = arith.index_cast %211 : i32 to index
    %c0_132 = arith.constant 0 : index
    %213 = vector.load %arg3[%212, %c0_132] : memref<32x32xf32, #tpu.memory_space<vmem>>, vector<1x32xf32>
    %214 = arith.addf %210, %213 : vector<1x32xf32>
    %c26_133 = arith.constant 26 : index
    %c0_134 = arith.constant 0 : index
    %215 = vector.load %arg4[%c26_133, %c0_134] : memref<64x32xf32, #tpu.memory_space<vmem>>, vector<1x32xf32>
    tpu.vector_store %arg4[%c26_133, %c0_134], %214 {strides = array<i32>} : memref<64x32xf32, #tpu.memory_space<vmem>>, vector<1x32xf32>,
    %c27 = arith.constant 27 : index
    %216 = memref.load %arg1[%c27] : memref<64xi32, #tpu.memory_space<smem>>
    %217 = arith.index_cast %216 : i32 to index
    %c0_135 = arith.constant 0 : index
    %218 = vector.load %arg3[%217, %c0_135] : memref<32x32xf32, #tpu.memory_space<vmem>>, vector<1x32xf32>
    %c27_136 = arith.constant 27 : index
    %219 = memref.load %arg2[%c27_136] : memref<64xi32, #tpu.memory_space<smem>>
    %220 = arith.index_cast %219 : i32 to index
    %c0_137 = arith.constant 0 : index
    %221 = vector.load %arg3[%220, %c0_137] : memref<32x32xf32, #tpu.memory_space<vmem>>, vector<1x32xf32>
    %222 = arith.addf %218, %221 : vector<1x32xf32>
    %c27_138 = arith.constant 27 : index
    %c0_139 = arith.constant 0 : index
    %223 = vector.load %arg4[%c27_138, %c0_139] : memref<64x32xf32, #tpu.memory_space<vmem>>, vector<1x32xf32>
    tpu.vector_store %arg4[%c27_138, %c0_139], %222 {strides = array<i32>} : memref<64x32xf32, #tpu.memory_space<vmem>>, vector<1x32xf32>,
    %c28 = arith.constant 28 : index
    %224 = memref.load %arg1[%c28] : memref<64xi32, #tpu.memory_space<smem>>
    %225 = arith.index_cast %224 : i32 to index
    %c0_140 = arith.constant 0 : index
    %226 = vector.load %arg3[%225, %c0_140] : memref<32x32xf32, #tpu.memory_space<vmem>>, vector<1x32xf32>
    %c28_141 = arith.constant 28 : index
    %227 = memref.load %arg2[%c28_141] : memref<64xi32, #tpu.memory_space<smem>>
    %228 = arith.index_cast %227 : i32 to index
    %c0_142 = arith.constant 0 : index
    %229 = vector.load %arg3[%228, %c0_142] : memref<32x32xf32, #tpu.memory_space<vmem>>, vector<1x32xf32>
    %230 = arith.addf %226, %229 : vector<1x32xf32>
    %c28_143 = arith.constant 28 : index
    %c0_144 = arith.constant 0 : index
    %231 = vector.load %arg4[%c28_143, %c0_144] : memref<64x32xf32, #tpu.memory_space<vmem>>, vector<1x32xf32>
    tpu.vector_store %arg4[%c28_143, %c0_144], %230 {strides = array<i32>} : memref<64x32xf32, #tpu.memory_space<vmem>>, vector<1x32xf32>,
    %c29 = arith.constant 29 : index
    %232 = memref.load %arg1[%c29] : memref<64xi32, #tpu.memory_space<smem>>
    %233 = arith.index_cast %232 : i32 to index
    %c0_145 = arith.constant 0 : index
    %234 = vector.load %arg3[%233, %c0_145] : memref<32x32xf32, #tpu.memory_space<vmem>>, vector<1x32xf32>
    %c29_146 = arith.constant 29 : index
    %235 = memref.load %arg2[%c29_146] : memref<64xi32, #tpu.memory_space<smem>>
    %236 = arith.index_cast %235 : i32 to index
    %c0_147 = arith.constant 0 : index
    %237 = vector.load %arg3[%236, %c0_147] : memref<32x32xf32, #tpu.memory_space<vmem>>, vector<1x32xf32>
    %238 = arith.addf %234, %237 : vector<1x32xf32>
    %c29_148 = arith.constant 29 : index
    %c0_149 = arith.constant 0 : index
    %239 = vector.load %arg4[%c29_148, %c0_149] : memref<64x32xf32, #tpu.memory_space<vmem>>, vector<1x32xf32>
    tpu.vector_store %arg4[%c29_148, %c0_149], %238 {strides = array<i32>} : memref<64x32xf32, #tpu.memory_space<vmem>>, vector<1x32xf32>,
    %c30 = arith.constant 30 : index
    %240 = memref.load %arg1[%c30] : memref<64xi32, #tpu.memory_space<smem>>
    %241 = arith.index_cast %240 : i32 to index
    %c0_150 = arith.constant 0 : index
    %242 = vector.load %arg3[%241, %c0_150] : memref<32x32xf32, #tpu.memory_space<vmem>>, vector<1x32xf32>
    %c30_151 = arith.constant 30 : index
    %243 = memref.load %arg2[%c30_151] : memref<64xi32, #tpu.memory_space<smem>>
    %244 = arith.index_cast %243 : i32 to index
    %c0_152 = arith.constant 0 : index
    %245 = vector.load %arg3[%244, %c0_152] : memref<32x32xf32, #tpu.memory_space<vmem>>, vector<1x32xf32>
    %246 = arith.addf %242, %245 : vector<1x32xf32>
    %c30_153 = arith.constant 30 : index
    %c0_154 = arith.constant 0 : index
    %247 = vector.load %arg4[%c30_153, %c0_154] : memref<64x32xf32, #tpu.memory_space<vmem>>, vector<1x32xf32>
    tpu.vector_store %arg4[%c30_153, %c0_154], %246 {strides = array<i32>} : memref<64x32xf32, #tpu.memory_space<vmem>>, vector<1x32xf32>,
    %c31 = arith.constant 31 : index
    %248 = memref.load %arg1[%c31] : memref<64xi32, #tpu.memory_space<smem>>
    %249 = arith.index_cast %248 : i32 to index
    %c0_155 = arith.constant 0 : index
    %250 = vector.load %arg3[%249, %c0_155] : memref<32x32xf32, #tpu.memory_space<vmem>>, vector<1x32xf32>
    %c31_156 = arith.constant 31 : index
    %251 = memref.load %arg2[%c31_156] : memref<64xi32, #tpu.memory_space<smem>>
    %252 = arith.index_cast %251 : i32 to index
    %c0_157 = arith.constant 0 : index
    %253 = vector.load %arg3[%252, %c0_157] : memref<32x32xf32, #tpu.memory_space<vmem>>, vector<1x32xf32>
    %254 = arith.addf %250, %253 : vector<1x32xf32>
    %c31_158 = arith.constant 31 : index
    %c0_159 = arith.constant 0 : index
    %255 = vector.load %arg4[%c31_158, %c0_159] : memref<64x32xf32, #tpu.memory_space<vmem>>, vector<1x32xf32>
    tpu.vector_store %arg4[%c31_158, %c0_159], %254 {strides = array<i32>} : memref<64x32xf32, #tpu.memory_space<vmem>>, vector<1x32xf32>,
    %c32 = arith.constant 32 : index
    %256 = memref.load %arg1[%c32] : memref<64xi32, #tpu.memory_space<smem>>
    %257 = arith.index_cast %256 : i32 to index
    %c0_160 = arith.constant 0 : index
    %258 = vector.load %arg3[%257, %c0_160] : memref<32x32xf32, #tpu.memory_space<vmem>>, vector<1x32xf32>
    %c32_161 = arith.constant 32 : index
    %259 = memref.load %arg2[%c32_161] : memref<64xi32, #tpu.memory_space<smem>>
    %260 = arith.index_cast %259 : i32 to index
    %c0_162 = arith.constant 0 : index
    %261 = vector.load %arg3[%260, %c0_162] : memref<32x32xf32, #tpu.memory_space<vmem>>, vector<1x32xf32>
    %262 = arith.addf %258, %261 : vector<1x32xf32>
    %c32_163 = arith.constant 32 : index
    %c0_164 = arith.constant 0 : index
    %263 = vector.load %arg4[%c32_163, %c0_164] : memref<64x32xf32, #tpu.memory_space<vmem>>, vector<1x32xf32>
    tpu.vector_store %arg4[%c32_163, %c0_164], %262 {strides = array<i32>} : memref<64x32xf32, #tpu.memory_space<vmem>>, vector<1x32xf32>,
    %c33 = arith.constant 33 : index
    %264 = memref.load %arg1[%c33] : memref<64xi32, #tpu.memory_space<smem>>
    %265 = arith.index_cast %264 : i32 to index
    %c0_165 = arith.constant 0 : index
    %266 = vector.load %arg3[%265, %c0_165] : memref<32x32xf32, #tpu.memory_space<vmem>>, vector<1x32xf32>
    %c33_166 = arith.constant 33 : index
    %267 = memref.load %arg2[%c33_166] : memref<64xi32, #tpu.memory_space<smem>>
    %268 = arith.index_cast %267 : i32 to index
    %c0_167 = arith.constant 0 : index
    %269 = vector.load %arg3[%268, %c0_167] : memref<32x32xf32, #tpu.memory_space<vmem>>, vector<1x32xf32>
    %270 = arith.addf %266, %269 : vector<1x32xf32>
    %c33_168 = arith.constant 33 : index
    %c0_169 = arith.constant 0 : index
    %271 = vector.load %arg4[%c33_168, %c0_169] : memref<64x32xf32, #tpu.memory_space<vmem>>, vector<1x32xf32>
    tpu.vector_store %arg4[%c33_168, %c0_169], %270 {strides = array<i32>} : memref<64x32xf32, #tpu.memory_space<vmem>>, vector<1x32xf32>,
    %c34 = arith.constant 34 : index
    %272 = memref.load %arg1[%c34] : memref<64xi32, #tpu.memory_space<smem>>
    %273 = arith.index_cast %272 : i32 to index
    %c0_170 = arith.constant 0 : index
    %274 = vector.load %arg3[%273, %c0_170] : memref<32x32xf32, #tpu.memory_space<vmem>>, vector<1x32xf32>
    %c34_171 = arith.constant 34 : index
    %275 = memref.load %arg2[%c34_171] : memref<64xi32, #tpu.memory_space<smem>>
    %276 = arith.index_cast %275 : i32 to index
    %c0_172 = arith.constant 0 : index
    %277 = vector.load %arg3[%276, %c0_172] : memref<32x32xf32, #tpu.memory_space<vmem>>, vector<1x32xf32>
    %278 = arith.addf %274, %277 : vector<1x32xf32>
    %c34_173 = arith.constant 34 : index
    %c0_174 = arith.constant 0 : index
    %279 = vector.load %arg4[%c34_173, %c0_174] : memref<64x32xf32, #tpu.memory_space<vmem>>, vector<1x32xf32>
    tpu.vector_store %arg4[%c34_173, %c0_174], %278 {strides = array<i32>} : memref<64x32xf32, #tpu.memory_space<vmem>>, vector<1x32xf32>,
    %c35 = arith.constant 35 : index
    %280 = memref.load %arg1[%c35] : memref<64xi32, #tpu.memory_space<smem>>
    %281 = arith.index_cast %280 : i32 to index
    %c0_175 = arith.constant 0 : index
    %282 = vector.load %arg3[%281, %c0_175] : memref<32x32xf32, #tpu.memory_space<vmem>>, vector<1x32xf32>
    %c35_176 = arith.constant 35 : index
    %283 = memref.load %arg2[%c35_176] : memref<64xi32, #tpu.memory_space<smem>>
    %284 = arith.index_cast %283 : i32 to index
    %c0_177 = arith.constant 0 : index
    %285 = vector.load %arg3[%284, %c0_177] : memref<32x32xf32, #tpu.memory_space<vmem>>, vector<1x32xf32>
    %286 = arith.addf %282, %285 : vector<1x32xf32>
    %c35_178 = arith.constant 35 : index
    %c0_179 = arith.constant 0 : index
    %287 = vector.load %arg4[%c35_178, %c0_179] : memref<64x32xf32, #tpu.memory_space<vmem>>, vector<1x32xf32>
    tpu.vector_store %arg4[%c35_178, %c0_179], %286 {strides = array<i32>} : memref<64x32xf32, #tpu.memory_space<vmem>>, vector<1x32xf32>,
    %c36 = arith.constant 36 : index
    %288 = memref.load %arg1[%c36] : memref<64xi32, #tpu.memory_space<smem>>
    %289 = arith.index_cast %288 : i32 to index
    %c0_180 = arith.constant 0 : index
    %290 = vector.load %arg3[%289, %c0_180] : memref<32x32xf32, #tpu.memory_space<vmem>>, vector<1x32xf32>
    %c36_181 = arith.constant 36 : index
    %291 = memref.load %arg2[%c36_181] : memref<64xi32, #tpu.memory_space<smem>>
    %292 = arith.index_cast %291 : i32 to index
    %c0_182 = arith.constant 0 : index
    %293 = vector.load %arg3[%292, %c0_182] : memref<32x32xf32, #tpu.memory_space<vmem>>, vector<1x32xf32>
    %294 = arith.addf %290, %293 : vector<1x32xf32>
    %c36_183 = arith.constant 36 : index
    %c0_184 = arith.constant 0 : index
    %295 = vector.load %arg4[%c36_183, %c0_184] : memref<64x32xf32, #tpu.memory_space<vmem>>, vector<1x32xf32>
    tpu.vector_store %arg4[%c36_183, %c0_184], %294 {strides = array<i32>} : memref<64x32xf32, #tpu.memory_space<vmem>>, vector<1x32xf32>,
    %c37 = arith.constant 37 : index
    %296 = memref.load %arg1[%c37] : memref<64xi32, #tpu.memory_space<smem>>
    %297 = arith.index_cast %296 : i32 to index
    %c0_185 = arith.constant 0 : index
    %298 = vector.load %arg3[%297, %c0_185] : memref<32x32xf32, #tpu.memory_space<vmem>>, vector<1x32xf32>
    %c37_186 = arith.constant 37 : index
    %299 = memref.load %arg2[%c37_186] : memref<64xi32, #tpu.memory_space<smem>>
    %300 = arith.index_cast %299 : i32 to index
    %c0_187 = arith.constant 0 : index
    %301 = vector.load %arg3[%300, %c0_187] : memref<32x32xf32, #tpu.memory_space<vmem>>, vector<1x32xf32>
    %302 = arith.addf %298, %301 : vector<1x32xf32>
    %c37_188 = arith.constant 37 : index
    %c0_189 = arith.constant 0 : index
    %303 = vector.load %arg4[%c37_188, %c0_189] : memref<64x32xf32, #tpu.memory_space<vmem>>, vector<1x32xf32>
    tpu.vector_store %arg4[%c37_188, %c0_189], %302 {strides = array<i32>} : memref<64x32xf32, #tpu.memory_space<vmem>>, vector<1x32xf32>,
    %c38 = arith.constant 38 : index
    %304 = memref.load %arg1[%c38] : memref<64xi32, #tpu.memory_space<smem>>
    %305 = arith.index_cast %304 : i32 to index
    %c0_190 = arith.constant 0 : index
    %306 = vector.load %arg3[%305, %c0_190] : memref<32x32xf32, #tpu.memory_space<vmem>>, vector<1x32xf32>
    %c38_191 = arith.constant 38 : index
    %307 = memref.load %arg2[%c38_191] : memref<64xi32, #tpu.memory_space<smem>>
    %308 = arith.index_cast %307 : i32 to index
    %c0_192 = arith.constant 0 : index
    %309 = vector.load %arg3[%308, %c0_192] : memref<32x32xf32, #tpu.memory_space<vmem>>, vector<1x32xf32>
    %310 = arith.addf %306, %309 : vector<1x32xf32>
    %c38_193 = arith.constant 38 : index
    %c0_194 = arith.constant 0 : index
    %311 = vector.load %arg4[%c38_193, %c0_194] : memref<64x32xf32, #tpu.memory_space<vmem>>, vector<1x32xf32>
    tpu.vector_store %arg4[%c38_193, %c0_194], %310 {strides = array<i32>} : memref<64x32xf32, #tpu.memory_space<vmem>>, vector<1x32xf32>,
    %c39 = arith.constant 39 : index
    %312 = memref.load %arg1[%c39] : memref<64xi32, #tpu.memory_space<smem>>
    %313 = arith.index_cast %312 : i32 to index
    %c0_195 = arith.constant 0 : index
    %314 = vector.load %arg3[%313, %c0_195] : memref<32x32xf32, #tpu.memory_space<vmem>>, vector<1x32xf32>
    %c39_196 = arith.constant 39 : index
    %315 = memref.load %arg2[%c39_196] : memref<64xi32, #tpu.memory_space<smem>>
    %316 = arith.index_cast %315 : i32 to index
    %c0_197 = arith.constant 0 : index
    %317 = vector.load %arg3[%316, %c0_197] : memref<32x32xf32, #tpu.memory_space<vmem>>, vector<1x32xf32>
    %318 = arith.addf %314, %317 : vector<1x32xf32>
    %c39_198 = arith.constant 39 : index
    %c0_199 = arith.constant 0 : index
    %319 = vector.load %arg4[%c39_198, %c0_199] : memref<64x32xf32, #tpu.memory_space<vmem>>, vector<1x32xf32>
    tpu.vector_store %arg4[%c39_198, %c0_199], %318 {strides = array<i32>} : memref<64x32xf32, #tpu.memory_space<vmem>>, vector<1x32xf32>,
    %c40 = arith.constant 40 : index
    %320 = memref.load %arg1[%c40] : memref<64xi32, #tpu.memory_space<smem>>
    %321 = arith.index_cast %320 : i32 to index
    %c0_200 = arith.constant 0 : index
    %322 = vector.load %arg3[%321, %c0_200] : memref<32x32xf32, #tpu.memory_space<vmem>>, vector<1x32xf32>
    %c40_201 = arith.constant 40 : index
    %323 = memref.load %arg2[%c40_201] : memref<64xi32, #tpu.memory_space<smem>>
    %324 = arith.index_cast %323 : i32 to index
    %c0_202 = arith.constant 0 : index
    %325 = vector.load %arg3[%324, %c0_202] : memref<32x32xf32, #tpu.memory_space<vmem>>, vector<1x32xf32>
    %326 = arith.addf %322, %325 : vector<1x32xf32>
    %c40_203 = arith.constant 40 : index
    %c0_204 = arith.constant 0 : index
    %327 = vector.load %arg4[%c40_203, %c0_204] : memref<64x32xf32, #tpu.memory_space<vmem>>, vector<1x32xf32>
    tpu.vector_store %arg4[%c40_203, %c0_204], %326 {strides = array<i32>} : memref<64x32xf32, #tpu.memory_space<vmem>>, vector<1x32xf32>,
    %c41 = arith.constant 41 : index
    %328 = memref.load %arg1[%c41] : memref<64xi32, #tpu.memory_space<smem>>
    %329 = arith.index_cast %328 : i32 to index
    %c0_205 = arith.constant 0 : index
    %330 = vector.load %arg3[%329, %c0_205] : memref<32x32xf32, #tpu.memory_space<vmem>>, vector<1x32xf32>
    %c41_206 = arith.constant 41 : index
    %331 = memref.load %arg2[%c41_206] : memref<64xi32, #tpu.memory_space<smem>>
    %332 = arith.index_cast %331 : i32 to index
    %c0_207 = arith.constant 0 : index
    %333 = vector.load %arg3[%332, %c0_207] : memref<32x32xf32, #tpu.memory_space<vmem>>, vector<1x32xf32>
    %334 = arith.addf %330, %333 : vector<1x32xf32>
    %c41_208 = arith.constant 41 : index
    %c0_209 = arith.constant 0 : index
    %335 = vector.load %arg4[%c41_208, %c0_209] : memref<64x32xf32, #tpu.memory_space<vmem>>, vector<1x32xf32>
    tpu.vector_store %arg4[%c41_208, %c0_209], %334 {strides = array<i32>} : memref<64x32xf32, #tpu.memory_space<vmem>>, vector<1x32xf32>,
    %c42 = arith.constant 42 : index
    %336 = memref.load %arg1[%c42] : memref<64xi32, #tpu.memory_space<smem>>
    %337 = arith.index_cast %336 : i32 to index
    %c0_210 = arith.constant 0 : index
    %338 = vector.load %arg3[%337, %c0_210] : memref<32x32xf32, #tpu.memory_space<vmem>>, vector<1x32xf32>
    %c42_211 = arith.constant 42 : index
    %339 = memref.load %arg2[%c42_211] : memref<64xi32, #tpu.memory_space<smem>>
    %340 = arith.index_cast %339 : i32 to index
    %c0_212 = arith.constant 0 : index
    %341 = vector.load %arg3[%340, %c0_212] : memref<32x32xf32, #tpu.memory_space<vmem>>, vector<1x32xf32>
    %342 = arith.addf %338, %341 : vector<1x32xf32>
    %c42_213 = arith.constant 42 : index
    %c0_214 = arith.constant 0 : index
    %343 = vector.load %arg4[%c42_213, %c0_214] : memref<64x32xf32, #tpu.memory_space<vmem>>, vector<1x32xf32>
    tpu.vector_store %arg4[%c42_213, %c0_214], %342 {strides = array<i32>} : memref<64x32xf32, #tpu.memory_space<vmem>>, vector<1x32xf32>,
    %c43 = arith.constant 43 : index
    %344 = memref.load %arg1[%c43] : memref<64xi32, #tpu.memory_space<smem>>
    %345 = arith.index_cast %344 : i32 to index
    %c0_215 = arith.constant 0 : index
    %346 = vector.load %arg3[%345, %c0_215] : memref<32x32xf32, #tpu.memory_space<vmem>>, vector<1x32xf32>
    %c43_216 = arith.constant 43 : index
    %347 = memref.load %arg2[%c43_216] : memref<64xi32, #tpu.memory_space<smem>>
    %348 = arith.index_cast %347 : i32 to index
    %c0_217 = arith.constant 0 : index
    %349 = vector.load %arg3[%348, %c0_217] : memref<32x32xf32, #tpu.memory_space<vmem>>, vector<1x32xf32>
    %350 = arith.addf %346, %349 : vector<1x32xf32>
    %c43_218 = arith.constant 43 : index
    %c0_219 = arith.constant 0 : index
    %351 = vector.load %arg4[%c43_218, %c0_219] : memref<64x32xf32, #tpu.memory_space<vmem>>, vector<1x32xf32>
    tpu.vector_store %arg4[%c43_218, %c0_219], %350 {strides = array<i32>} : memref<64x32xf32, #tpu.memory_space<vmem>>, vector<1x32xf32>,
    %c44 = arith.constant 44 : index
    %352 = memref.load %arg1[%c44] : memref<64xi32, #tpu.memory_space<smem>>
    %353 = arith.index_cast %352 : i32 to index
    %c0_220 = arith.constant 0 : index
    %354 = vector.load %arg3[%353, %c0_220] : memref<32x32xf32, #tpu.memory_space<vmem>>, vector<1x32xf32>
    %c44_221 = arith.constant 44 : index
    %355 = memref.load %arg2[%c44_221] : memref<64xi32, #tpu.memory_space<smem>>
    %356 = arith.index_cast %355 : i32 to index
    %c0_222 = arith.constant 0 : index
    %357 = vector.load %arg3[%356, %c0_222] : memref<32x32xf32, #tpu.memory_space<vmem>>, vector<1x32xf32>
    %358 = arith.addf %354, %357 : vector<1x32xf32>
    %c44_223 = arith.constant 44 : index
    %c0_224 = arith.constant 0 : index
    %359 = vector.load %arg4[%c44_223, %c0_224] : memref<64x32xf32, #tpu.memory_space<vmem>>, vector<1x32xf32>
    tpu.vector_store %arg4[%c44_223, %c0_224], %358 {strides = array<i32>} : memref<64x32xf32, #tpu.memory_space<vmem>>, vector<1x32xf32>,
    %c45 = arith.constant 45 : index
    %360 = memref.load %arg1[%c45] : memref<64xi32, #tpu.memory_space<smem>>
    %361 = arith.index_cast %360 : i32 to index
    %c0_225 = arith.constant 0 : index
    %362 = vector.load %arg3[%361, %c0_225] : memref<32x32xf32, #tpu.memory_space<vmem>>, vector<1x32xf32>
    %c45_226 = arith.constant 45 : index
    %363 = memref.load %arg2[%c45_226] : memref<64xi32, #tpu.memory_space<smem>>
    %364 = arith.index_cast %363 : i32 to index
    %c0_227 = arith.constant 0 : index
    %365 = vector.load %arg3[%364, %c0_227] : memref<32x32xf32, #tpu.memory_space<vmem>>, vector<1x32xf32>
    %366 = arith.addf %362, %365 : vector<1x32xf32>
    %c45_228 = arith.constant 45 : index
    %c0_229 = arith.constant 0 : index
    %367 = vector.load %arg4[%c45_228, %c0_229] : memref<64x32xf32, #tpu.memory_space<vmem>>, vector<1x32xf32>
    tpu.vector_store %arg4[%c45_228, %c0_229], %366 {strides = array<i32>} : memref<64x32xf32, #tpu.memory_space<vmem>>, vector<1x32xf32>,
    %c46 = arith.constant 46 : index
    %368 = memref.load %arg1[%c46] : memref<64xi32, #tpu.memory_space<smem>>
    %369 = arith.index_cast %368 : i32 to index
    %c0_230 = arith.constant 0 : index
    %370 = vector.load %arg3[%369, %c0_230] : memref<32x32xf32, #tpu.memory_space<vmem>>, vector<1x32xf32>
    %c46_231 = arith.constant 46 : index
    %371 = memref.load %arg2[%c46_231] : memref<64xi32, #tpu.memory_space<smem>>
    %372 = arith.index_cast %371 : i32 to index
    %c0_232 = arith.constant 0 : index
    %373 = vector.load %arg3[%372, %c0_232] : memref<32x32xf32, #tpu.memory_space<vmem>>, vector<1x32xf32>
    %374 = arith.addf %370, %373 : vector<1x32xf32>
    %c46_233 = arith.constant 46 : index
    %c0_234 = arith.constant 0 : index
    %375 = vector.load %arg4[%c46_233, %c0_234] : memref<64x32xf32, #tpu.memory_space<vmem>>, vector<1x32xf32>
    tpu.vector_store %arg4[%c46_233, %c0_234], %374 {strides = array<i32>} : memref<64x32xf32, #tpu.memory_space<vmem>>, vector<1x32xf32>,
    %c47 = arith.constant 47 : index
    %376 = memref.load %arg1[%c47] : memref<64xi32, #tpu.memory_space<smem>>
    %377 = arith.index_cast %376 : i32 to index
    %c0_235 = arith.constant 0 : index
    %378 = vector.load %arg3[%377, %c0_235] : memref<32x32xf32, #tpu.memory_space<vmem>>, vector<1x32xf32>
    %c47_236 = arith.constant 47 : index
    %379 = memref.load %arg2[%c47_236] : memref<64xi32, #tpu.memory_space<smem>>
    %380 = arith.index_cast %379 : i32 to index
    %c0_237 = arith.constant 0 : index
    %381 = vector.load %arg3[%380, %c0_237] : memref<32x32xf32, #tpu.memory_space<vmem>>, vector<1x32xf32>
    %382 = arith.addf %378, %381 : vector<1x32xf32>
    %c47_238 = arith.constant 47 : index
    %c0_239 = arith.constant 0 : index
    %383 = vector.load %arg4[%c47_238, %c0_239] : memref<64x32xf32, #tpu.memory_space<vmem>>, vector<1x32xf32>
    tpu.vector_store %arg4[%c47_238, %c0_239], %382 {strides = array<i32>} : memref<64x32xf32, #tpu.memory_space<vmem>>, vector<1x32xf32>,
    %c48 = arith.constant 48 : index
    %384 = memref.load %arg1[%c48] : memref<64xi32, #tpu.memory_space<smem>>
    %385 = arith.index_cast %384 : i32 to index
    %c0_240 = arith.constant 0 : index
    %386 = vector.load %arg3[%385, %c0_240] : memref<32x32xf32, #tpu.memory_space<vmem>>, vector<1x32xf32>
    %c48_241 = arith.constant 48 : index
    %387 = memref.load %arg2[%c48_241] : memref<64xi32, #tpu.memory_space<smem>>
    %388 = arith.index_cast %387 : i32 to index
    %c0_242 = arith.constant 0 : index
    %389 = vector.load %arg3[%388, %c0_242] : memref<32x32xf32, #tpu.memory_space<vmem>>, vector<1x32xf32>
    %390 = arith.addf %386, %389 : vector<1x32xf32>
    %c48_243 = arith.constant 48 : index
    %c0_244 = arith.constant 0 : index
    %391 = vector.load %arg4[%c48_243, %c0_244] : memref<64x32xf32, #tpu.memory_space<vmem>>, vector<1x32xf32>
    tpu.vector_store %arg4[%c48_243, %c0_244], %390 {strides = array<i32>} : memref<64x32xf32, #tpu.memory_space<vmem>>, vector<1x32xf32>,
    %c49 = arith.constant 49 : index
    %392 = memref.load %arg1[%c49] : memref<64xi32, #tpu.memory_space<smem>>
    %393 = arith.index_cast %392 : i32 to index
    %c0_245 = arith.constant 0 : index
    %394 = vector.load %arg3[%393, %c0_245] : memref<32x32xf32, #tpu.memory_space<vmem>>, vector<1x32xf32>
    %c49_246 = arith.constant 49 : index
    %395 = memref.load %arg2[%c49_246] : memref<64xi32, #tpu.memory_space<smem>>
    %396 = arith.index_cast %395 : i32 to index
    %c0_247 = arith.constant 0 : index
    %397 = vector.load %arg3[%396, %c0_247] : memref<32x32xf32, #tpu.memory_space<vmem>>, vector<1x32xf32>
    %398 = arith.addf %394, %397 : vector<1x32xf32>
    %c49_248 = arith.constant 49 : index
    %c0_249 = arith.constant 0 : index
    %399 = vector.load %arg4[%c49_248, %c0_249] : memref<64x32xf32, #tpu.memory_space<vmem>>, vector<1x32xf32>
    tpu.vector_store %arg4[%c49_248, %c0_249], %398 {strides = array<i32>} : memref<64x32xf32, #tpu.memory_space<vmem>>, vector<1x32xf32>,
    %c50 = arith.constant 50 : index
    %400 = memref.load %arg1[%c50] : memref<64xi32, #tpu.memory_space<smem>>
    %401 = arith.index_cast %400 : i32 to index
    %c0_250 = arith.constant 0 : index
    %402 = vector.load %arg3[%401, %c0_250] : memref<32x32xf32, #tpu.memory_space<vmem>>, vector<1x32xf32>
    %c50_251 = arith.constant 50 : index
    %403 = memref.load %arg2[%c50_251] : memref<64xi32, #tpu.memory_space<smem>>
    %404 = arith.index_cast %403 : i32 to index
    %c0_252 = arith.constant 0 : index
    %405 = vector.load %arg3[%404, %c0_252] : memref<32x32xf32, #tpu.memory_space<vmem>>, vector<1x32xf32>
    %406 = arith.addf %402, %405 : vector<1x32xf32>
    %c50_253 = arith.constant 50 : index
    %c0_254 = arith.constant 0 : index
    %407 = vector.load %arg4[%c50_253, %c0_254] : memref<64x32xf32, #tpu.memory_space<vmem>>, vector<1x32xf32>
    tpu.vector_store %arg4[%c50_253, %c0_254], %406 {strides = array<i32>} : memref<64x32xf32, #tpu.memory_space<vmem>>, vector<1x32xf32>,
    %c51 = arith.constant 51 : index
    %408 = memref.load %arg1[%c51] : memref<64xi32, #tpu.memory_space<smem>>
    %409 = arith.index_cast %408 : i32 to index
    %c0_255 = arith.constant 0 : index
    %410 = vector.load %arg3[%409, %c0_255] : memref<32x32xf32, #tpu.memory_space<vmem>>, vector<1x32xf32>
    %c51_256 = arith.constant 51 : index
    %411 = memref.load %arg2[%c51_256] : memref<64xi32, #tpu.memory_space<smem>>
    %412 = arith.index_cast %411 : i32 to index
    %c0_257 = arith.constant 0 : index
    %413 = vector.load %arg3[%412, %c0_257] : memref<32x32xf32, #tpu.memory_space<vmem>>, vector<1x32xf32>
    %414 = arith.addf %410, %413 : vector<1x32xf32>
    %c51_258 = arith.constant 51 : index
    %c0_259 = arith.constant 0 : index
    %415 = vector.load %arg4[%c51_258, %c0_259] : memref<64x32xf32, #tpu.memory_space<vmem>>, vector<1x32xf32>
    tpu.vector_store %arg4[%c51_258, %c0_259], %414 {strides = array<i32>} : memref<64x32xf32, #tpu.memory_space<vmem>>, vector<1x32xf32>,
    %c52 = arith.constant 52 : index
    %416 = memref.load %arg1[%c52] : memref<64xi32, #tpu.memory_space<smem>>
    %417 = arith.index_cast %416 : i32 to index
    %c0_260 = arith.constant 0 : index
    %418 = vector.load %arg3[%417, %c0_260] : memref<32x32xf32, #tpu.memory_space<vmem>>, vector<1x32xf32>
    %c52_261 = arith.constant 52 : index
    %419 = memref.load %arg2[%c52_261] : memref<64xi32, #tpu.memory_space<smem>>
    %420 = arith.index_cast %419 : i32 to index
    %c0_262 = arith.constant 0 : index
    %421 = vector.load %arg3[%420, %c0_262] : memref<32x32xf32, #tpu.memory_space<vmem>>, vector<1x32xf32>
    %422 = arith.addf %418, %421 : vector<1x32xf32>
    %c52_263 = arith.constant 52 : index
    %c0_264 = arith.constant 0 : index
    %423 = vector.load %arg4[%c52_263, %c0_264] : memref<64x32xf32, #tpu.memory_space<vmem>>, vector<1x32xf32>
    tpu.vector_store %arg4[%c52_263, %c0_264], %422 {strides = array<i32>} : memref<64x32xf32, #tpu.memory_space<vmem>>, vector<1x32xf32>,
    %c53 = arith.constant 53 : index
    %424 = memref.load %arg1[%c53] : memref<64xi32, #tpu.memory_space<smem>>
    %425 = arith.index_cast %424 : i32 to index
    %c0_265 = arith.constant 0 : index
    %426 = vector.load %arg3[%425, %c0_265] : memref<32x32xf32, #tpu.memory_space<vmem>>, vector<1x32xf32>
    %c53_266 = arith.constant 53 : index
    %427 = memref.load %arg2[%c53_266] : memref<64xi32, #tpu.memory_space<smem>>
    %428 = arith.index_cast %427 : i32 to index
    %c0_267 = arith.constant 0 : index
    %429 = vector.load %arg3[%428, %c0_267] : memref<32x32xf32, #tpu.memory_space<vmem>>, vector<1x32xf32>
    %430 = arith.addf %426, %429 : vector<1x32xf32>
    %c53_268 = arith.constant 53 : index
    %c0_269 = arith.constant 0 : index
    %431 = vector.load %arg4[%c53_268, %c0_269] : memref<64x32xf32, #tpu.memory_space<vmem>>, vector<1x32xf32>
    tpu.vector_store %arg4[%c53_268, %c0_269], %430 {strides = array<i32>} : memref<64x32xf32, #tpu.memory_space<vmem>>, vector<1x32xf32>,
    %c54 = arith.constant 54 : index
    %432 = memref.load %arg1[%c54] : memref<64xi32, #tpu.memory_space<smem>>
    %433 = arith.index_cast %432 : i32 to index
    %c0_270 = arith.constant 0 : index
    %434 = vector.load %arg3[%433, %c0_270] : memref<32x32xf32, #tpu.memory_space<vmem>>, vector<1x32xf32>
    %c54_271 = arith.constant 54 : index
    %435 = memref.load %arg2[%c54_271] : memref<64xi32, #tpu.memory_space<smem>>
    %436 = arith.index_cast %435 : i32 to index
    %c0_272 = arith.constant 0 : index
    %437 = vector.load %arg3[%436, %c0_272] : memref<32x32xf32, #tpu.memory_space<vmem>>, vector<1x32xf32>
    %438 = arith.addf %434, %437 : vector<1x32xf32>
    %c54_273 = arith.constant 54 : index
    %c0_274 = arith.constant 0 : index
    %439 = vector.load %arg4[%c54_273, %c0_274] : memref<64x32xf32, #tpu.memory_space<vmem>>, vector<1x32xf32>
    tpu.vector_store %arg4[%c54_273, %c0_274], %438 {strides = array<i32>} : memref<64x32xf32, #tpu.memory_space<vmem>>, vector<1x32xf32>,
    %c55 = arith.constant 55 : index
    %440 = memref.load %arg1[%c55] : memref<64xi32, #tpu.memory_space<smem>>
    %441 = arith.index_cast %440 : i32 to index
    %c0_275 = arith.constant 0 : index
    %442 = vector.load %arg3[%441, %c0_275] : memref<32x32xf32, #tpu.memory_space<vmem>>, vector<1x32xf32>
    %c55_276 = arith.constant 55 : index
    %443 = memref.load %arg2[%c55_276] : memref<64xi32, #tpu.memory_space<smem>>
    %444 = arith.index_cast %443 : i32 to index
    %c0_277 = arith.constant 0 : index
    %445 = vector.load %arg3[%444, %c0_277] : memref<32x32xf32, #tpu.memory_space<vmem>>, vector<1x32xf32>
    %446 = arith.addf %442, %445 : vector<1x32xf32>
    %c55_278 = arith.constant 55 : index
    %c0_279 = arith.constant 0 : index
    %447 = vector.load %arg4[%c55_278, %c0_279] : memref<64x32xf32, #tpu.memory_space<vmem>>, vector<1x32xf32>
    tpu.vector_store %arg4[%c55_278, %c0_279], %446 {strides = array<i32>} : memref<64x32xf32, #tpu.memory_space<vmem>>, vector<1x32xf32>,
    %c56 = arith.constant 56 : index
    %448 = memref.load %arg1[%c56] : memref<64xi32, #tpu.memory_space<smem>>
    %449 = arith.index_cast %448 : i32 to index
    %c0_280 = arith.constant 0 : index
    %450 = vector.load %arg3[%449, %c0_280] : memref<32x32xf32, #tpu.memory_space<vmem>>, vector<1x32xf32>
    %c56_281 = arith.constant 56 : index
    %451 = memref.load %arg2[%c56_281] : memref<64xi32, #tpu.memory_space<smem>>
    %452 = arith.index_cast %451 : i32 to index
    %c0_282 = arith.constant 0 : index
    %453 = vector.load %arg3[%452, %c0_282] : memref<32x32xf32, #tpu.memory_space<vmem>>, vector<1x32xf32>
    %454 = arith.addf %450, %453 : vector<1x32xf32>
    %c56_283 = arith.constant 56 : index
    %c0_284 = arith.constant 0 : index
    %455 = vector.load %arg4[%c56_283, %c0_284] : memref<64x32xf32, #tpu.memory_space<vmem>>, vector<1x32xf32>
    tpu.vector_store %arg4[%c56_283, %c0_284], %454 {strides = array<i32>} : memref<64x32xf32, #tpu.memory_space<vmem>>, vector<1x32xf32>,
    %c57 = arith.constant 57 : index
    %456 = memref.load %arg1[%c57] : memref<64xi32, #tpu.memory_space<smem>>
    %457 = arith.index_cast %456 : i32 to index
    %c0_285 = arith.constant 0 : index
    %458 = vector.load %arg3[%457, %c0_285] : memref<32x32xf32, #tpu.memory_space<vmem>>, vector<1x32xf32>
    %c57_286 = arith.constant 57 : index
    %459 = memref.load %arg2[%c57_286] : memref<64xi32, #tpu.memory_space<smem>>
    %460 = arith.index_cast %459 : i32 to index
    %c0_287 = arith.constant 0 : index
    %461 = vector.load %arg3[%460, %c0_287] : memref<32x32xf32, #tpu.memory_space<vmem>>, vector<1x32xf32>
    %462 = arith.addf %458, %461 : vector<1x32xf32>
    %c57_288 = arith.constant 57 : index
    %c0_289 = arith.constant 0 : index
    %463 = vector.load %arg4[%c57_288, %c0_289] : memref<64x32xf32, #tpu.memory_space<vmem>>, vector<1x32xf32>
    tpu.vector_store %arg4[%c57_288, %c0_289], %462 {strides = array<i32>} : memref<64x32xf32, #tpu.memory_space<vmem>>, vector<1x32xf32>,
    %c58 = arith.constant 58 : index
    %464 = memref.load %arg1[%c58] : memref<64xi32, #tpu.memory_space<smem>>
    %465 = arith.index_cast %464 : i32 to index
    %c0_290 = arith.constant 0 : index
    %466 = vector.load %arg3[%465, %c0_290] : memref<32x32xf32, #tpu.memory_space<vmem>>, vector<1x32xf32>
    %c58_291 = arith.constant 58 : index
    %467 = memref.load %arg2[%c58_291] : memref<64xi32, #tpu.memory_space<smem>>
    %468 = arith.index_cast %467 : i32 to index
    %c0_292 = arith.constant 0 : index
    %469 = vector.load %arg3[%468, %c0_292] : memref<32x32xf32, #tpu.memory_space<vmem>>, vector<1x32xf32>
    %470 = arith.addf %466, %469 : vector<1x32xf32>
    %c58_293 = arith.constant 58 : index
    %c0_294 = arith.constant 0 : index
    %471 = vector.load %arg4[%c58_293, %c0_294] : memref<64x32xf32, #tpu.memory_space<vmem>>, vector<1x32xf32>
    tpu.vector_store %arg4[%c58_293, %c0_294], %470 {strides = array<i32>} : memref<64x32xf32, #tpu.memory_space<vmem>>, vector<1x32xf32>,
    %c59 = arith.constant 59 : index
    %472 = memref.load %arg1[%c59] : memref<64xi32, #tpu.memory_space<smem>>
    %473 = arith.index_cast %472 : i32 to index
    %c0_295 = arith.constant 0 : index
    %474 = vector.load %arg3[%473, %c0_295] : memref<32x32xf32, #tpu.memory_space<vmem>>, vector<1x32xf32>
    %c59_296 = arith.constant 59 : index
    %475 = memref.load %arg2[%c59_296] : memref<64xi32, #tpu.memory_space<smem>>
    %476 = arith.index_cast %475 : i32 to index
    %c0_297 = arith.constant 0 : index
    %477 = vector.load %arg3[%476, %c0_297] : memref<32x32xf32, #tpu.memory_space<vmem>>, vector<1x32xf32>
    %478 = arith.addf %474, %477 : vector<1x32xf32>
    %c59_298 = arith.constant 59 : index
    %c0_299 = arith.constant 0 : index
    %479 = vector.load %arg4[%c59_298, %c0_299] : memref<64x32xf32, #tpu.memory_space<vmem>>, vector<1x32xf32>
    tpu.vector_store %arg4[%c59_298, %c0_299], %478 {strides = array<i32>} : memref<64x32xf32, #tpu.memory_space<vmem>>, vector<1x32xf32>,
    %c60 = arith.constant 60 : index
    %480 = memref.load %arg1[%c60] : memref<64xi32, #tpu.memory_space<smem>>
    %481 = arith.index_cast %480 : i32 to index
    %c0_300 = arith.constant 0 : index
    %482 = vector.load %arg3[%481, %c0_300] : memref<32x32xf32, #tpu.memory_space<vmem>>, vector<1x32xf32>
    %c60_301 = arith.constant 60 : index
    %483 = memref.load %arg2[%c60_301] : memref<64xi32, #tpu.memory_space<smem>>
    %484 = arith.index_cast %483 : i32 to index
    %c0_302 = arith.constant 0 : index
    %485 = vector.load %arg3[%484, %c0_302] : memref<32x32xf32, #tpu.memory_space<vmem>>, vector<1x32xf32>
    %486 = arith.addf %482, %485 : vector<1x32xf32>
    %c60_303 = arith.constant 60 : index
    %c0_304 = arith.constant 0 : index
    %487 = vector.load %arg4[%c60_303, %c0_304] : memref<64x32xf32, #tpu.memory_space<vmem>>, vector<1x32xf32>
    tpu.vector_store %arg4[%c60_303, %c0_304], %486 {strides = array<i32>} : memref<64x32xf32, #tpu.memory_space<vmem>>, vector<1x32xf32>,
    %c61 = arith.constant 61 : index
    %488 = memref.load %arg1[%c61] : memref<64xi32, #tpu.memory_space<smem>>
    %489 = arith.index_cast %488 : i32 to index
    %c0_305 = arith.constant 0 : index
    %490 = vector.load %arg3[%489, %c0_305] : memref<32x32xf32, #tpu.memory_space<vmem>>, vector<1x32xf32>
    %c61_306 = arith.constant 61 : index
    %491 = memref.load %arg2[%c61_306] : memref<64xi32, #tpu.memory_space<smem>>
    %492 = arith.index_cast %491 : i32 to index
    %c0_307 = arith.constant 0 : index
    %493 = vector.load %arg3[%492, %c0_307] : memref<32x32xf32, #tpu.memory_space<vmem>>, vector<1x32xf32>
    %494 = arith.addf %490, %493 : vector<1x32xf32>
    %c61_308 = arith.constant 61 : index
    %c0_309 = arith.constant 0 : index
    %495 = vector.load %arg4[%c61_308, %c0_309] : memref<64x32xf32, #tpu.memory_space<vmem>>, vector<1x32xf32>
    tpu.vector_store %arg4[%c61_308, %c0_309], %494 {strides = array<i32>} : memref<64x32xf32, #tpu.memory_space<vmem>>, vector<1x32xf32>,
    %c62 = arith.constant 62 : index
    %496 = memref.load %arg1[%c62] : memref<64xi32, #tpu.memory_space<smem>>
    %497 = arith.index_cast %496 : i32 to index
    %c0_310 = arith.constant 0 : index
    %498 = vector.load %arg3[%497, %c0_310] : memref<32x32xf32, #tpu.memory_space<vmem>>, vector<1x32xf32>
    %c62_311 = arith.constant 62 : index
    %499 = memref.load %arg2[%c62_311] : memref<64xi32, #tpu.memory_space<smem>>
    %500 = arith.index_cast %499 : i32 to index
    %c0_312 = arith.constant 0 : index
    %501 = vector.load %arg3[%500, %c0_312] : memref<32x32xf32, #tpu.memory_space<vmem>>, vector<1x32xf32>
    %502 = arith.addf %498, %501 : vector<1x32xf32>
    %c62_313 = arith.constant 62 : index
    %c0_314 = arith.constant 0 : index
    %503 = vector.load %arg4[%c62_313, %c0_314] : memref<64x32xf32, #tpu.memory_space<vmem>>, vector<1x32xf32>
    tpu.vector_store %arg4[%c62_313, %c0_314], %502 {strides = array<i32>} : memref<64x32xf32, #tpu.memory_space<vmem>>, vector<1x32xf32>,
    %c63 = arith.constant 63 : index
    %504 = memref.load %arg1[%c63] : memref<64xi32, #tpu.memory_space<smem>>
    %505 = arith.index_cast %504 : i32 to index
    %c0_315 = arith.constant 0 : index
    %506 = vector.load %arg3[%505, %c0_315] : memref<32x32xf32, #tpu.memory_space<vmem>>, vector<1x32xf32>
    %c63_316 = arith.constant 63 : index
    %507 = memref.load %arg2[%c63_316] : memref<64xi32, #tpu.memory_space<smem>>
    %508 = arith.index_cast %507 : i32 to index
    %c0_317 = arith.constant 0 : index
    %509 = vector.load %arg3[%508, %c0_317] : memref<32x32xf32, #tpu.memory_space<vmem>>, vector<1x32xf32>
    %510 = arith.addf %506, %509 : vector<1x32xf32>
    %c63_318 = arith.constant 63 : index
    %c0_319 = arith.constant 0 : index
    %511 = vector.load %arg4[%c63_318, %c0_319] : memref<64x32xf32, #tpu.memory_space<vmem>>, vector<1x32xf32>
    tpu.vector_store %arg4[%c63_318, %c0_319], %510 {strides = array<i32>} : memref<64x32xf32, #tpu.memory_space<vmem>>, vector<1x32xf32>,
    %c0_320 = arith.constant 0 : index
    %c0_321 = arith.constant 0 : index
    %512 = vector.load %arg4[%c0_320, %c0_321] : memref<64x32xf32, #tpu.memory_space<vmem>>, vector<64x32xf32>
    %cst = arith.constant dense<0.000000e+00> : vector<64xf32>
    %513 = vector.multi_reduction <add>, %512, %cst [1] : vector<64x32xf32> to vector<64xf32>
    %514 = vector.shape_cast %513 : vector<64xf32> to vector<64x1xf32>
    %cst_322 = arith.constant 3.200000e+01 : f32
    %515 = vector.broadcast %cst_322 : f32 to vector<64x1xf32>
    %516 = arith.divf %514, %515 : vector<64x1xf32>
    %517 = vector.broadcast %516 : vector<64x1xf32> to vector<64x32xf32>
    %518 = arith.subf %512, %517 : vector<64x32xf32>
    %519 = arith.mulf %518, %518 : vector<64x32xf32>
    %cst_323 = arith.constant dense<0.000000e+00> : vector<64xf32>
    %520 = vector.multi_reduction <add>, %519, %cst_323 [1] : vector<64x32xf32> to vector<64xf32>
    %521 = vector.shape_cast %520 : vector<64xf32> to vector<64x1xf32>
    %cst_324 = arith.constant 3.200000e+01 : f32
    %522 = vector.broadcast %cst_324 : f32 to vector<64x1xf32>
    %523 = arith.divf %521, %522 : vector<64x1xf32>
    %cst_325 = arith.constant 9.99999974E-6 : f32
    %524 = vector.broadcast %cst_325 : f32 to vector<64x1xf32>
    %525 = arith.addf %523, %524 : vector<64x1xf32>
    %526 = math.rsqrt %525 : vector<64x1xf32>
    %527 = vector.broadcast %526 : vector<64x1xf32> to vector<64x32xf32>
    %528 = arith.mulf %518, %527 : vector<64x32xf32>
    %c0_326 = arith.constant 0 : index
    %c0_327 = arith.constant 0 : index
    %529 = vector.load %arg4[%c0_326, %c0_327] : memref<64x32xf32, #tpu.memory_space<vmem>>, vector<64x32xf32>
    tpu.vector_store %arg4[%c0_326, %c0_327], %528 {strides = array<i32>} : memref<64x32xf32, #tpu.memory_space<vmem>>, vector<64x32xf32>,
    return
  }
  func.func @transform_0(%arg0: i32, %arg1: memref<64xi32, #tpu.memory_space<smem>>, %arg2: memref<64xi32, #tpu.memory_space<smem>>) -> (i32, i32) {
    %c0_i32 = arith.constant 0 : i32
    %c0_i32_0 = arith.constant 0 : i32
    %c0_i32_1 = arith.constant 0 : i32
    return %c0_i32, %c0_i32_0 : i32, i32
  }
  func.func @transform_1(%arg0: i32, %arg1: memref<64xi32, #tpu.memory_space<smem>>, %arg2: memref<64xi32, #tpu.memory_space<smem>>) -> (i32, i32) {
    %c0_i32 = arith.constant 0 : i32
    %c0_i32_0 = arith.constant 0 : i32
    %c0_i32_1 = arith.constant 0 : i32
    return %c0_i32, %c0_i32_0 : i32, i32
  }
}

</mosaic_0001>

<llo_original>
// kernel: relationship_attention.2
$region0: #{relationship_attention.2}
  #allocation0 [shape = 'u32[]', space=smem, size = 0x4, offset = 0x4, fixed_abs, tag = 'smem constant byte address 0x4 - core index']
  #allocation1 [shape = 'u32[144,128]{1,0:T(1,128)}', space=vmem, size = 0x12000, scoped, tag = 'internal scratch']
  %s0 = inlined_call_operand.vmem [shape: f32[2,16,32], index: 0, kind: input, shape index: {}]
  %s1 = inlined_call_operand.vmem [shape: f32[2,32,16], index: 1, kind: input, shape index: {}]
  %s2 = inlined_call_operand.vmem [shape: f32[2,16,16], index: 2, kind: output, shape index: {0}]
  %s3 = inlined_call_operand.vmem [shape: f32[2,16,1], index: 3, kind: output, shape index: {1}]
  %4 = xla_tuple %s2, %s3
  %s5 = sld [smem:[#allocation0]]
  $region26: #{relationship_attention.2} parent=0
    _
  %s7 = ssub.s32 1, %s5
  %s8 = scalar_select 0, %s7, %s5
  // Predicated region
  $region2: #{relationship_attention.2} parent=0 // pred_check
    _
  $region3: #{relationship_attention.2} parent=0 // pred_check_branch
    %10 = sbr.rel (0) target = $region5
  $region4: #{relationship_attention.2} parent=0 // pred_region
    _
  $region5: #{relationship_attention.2} parent=0 // pred_fallthru
    _
  // Predicated region
  $region6: #{relationship_attention.2} parent=0 // pred_check
    _
  $region7: #{relationship_attention.2} parent=0 // pred_check_branch
    %12 = sbr.rel (0) target = $region9
  $region8: #{relationship_attention.2} parent=0 // pred_region
    _
  $region9: #{relationship_attention.2} parent=0 // pred_fallthru
    _
  %v13 = vlaneseq
  %v14 = vshrl.u32 %v13, 7
  %v15 = vadd.s32 %v14, 8
  %v16 = vlaneseq
  %v17 = vand.u32 %v16, 127
  %vm18 = vcmp.eq.s32.totalorder %v14, %v17
  %vm19 = vcmp.eq.s32.totalorder %v15, %v17
  %v20 = vld [vmem:[%s0] sm:$0xff]
  %v21 = vld [vmem:[%s0 + $0x8] sm:$0xff]
  %v22 = vld [vmem:[%s1] sm:$0xff]
  %v23 = vld [vmem:[%s1 + $0x8] sm:$0xff]
  %v24 = vld [vmem:[%s1 + $0x10] sm:$0xff]
  %v25 = vld [vmem:[%s1 + $0x18] sm:$0xff]
  %vm26 = vcmask 261120
  %v28 = vsel %vm26, %v20, 0
  %v31 = vsel %vm26, %v21, 0
  %33 = vmatprep.subr.mxu0 0.0
  %34 = vmatpush1.msra.mxu0 %v22
  %35 = vmatprep.subr.mxu0 0.0
  %36 = vmatpush1.msra.mxu0 %v23
  %37 = vmatprep.subr.mxu0 0.0
  %38 = vmatpush1.msra.mxu0 %v24
  %39 = vmatprep.subr.mxu0 0.0
  %40 = vmatpush1.msra.mxu0 %v25
  %41 = vmatprep.subr.mxu0 0.0
  %42 = vmatpush1.msra.mxu0 0.0
  %43 = vmatprep.subr.mxu0 0.0
  %44 = vmatpush1.msra.mxu0 0.0
  %45 = vmatprep.subr.mxu0 0.0
  %46 = vmatpush1.msra.mxu0 0.0
  %47 = vmatprep.subr.mxu0 0.0
  %48 = vmatpush1.msra.mxu0 0.0
  %49 = vmatprep.subr.mxu0 0.0
  %50 = vmatpush1.msra.mxu0 0.0
  %51 = vmatprep.subr.mxu0 0.0
  %52 = vmatpush1.msra.mxu0 0.0
  %53 = vmatprep.subr.mxu0 0.0
  %54 = vmatpush1.msra.mxu0 0.0
  %55 = vmatprep.subr.mxu0 0.0
  %56 = vmatpush1.msra.mxu0 0.0
  %57 = vmatprep.subr.mxu0 0.0
  %58 = vmatpush1.msra.mxu0 0.0
  %59 = vmatprep.subr.mxu0 0.0
  %60 = vmatpush1.msra.mxu0 0.0
  %61 = vmatprep.subr.mxu0 0.0
  %62 = vmatpush1.msra.mxu0 0.0
  %63 = vmatprep.subr.mxu0 0.0
  %64 = vmatpush1.msra.mxu0 0.0
  %65 = vmatprep.subr.mxu0 0.0
  %66 = vmatpush1.msra.mxu0 0.0
  %67 = vmatprep.subr.mxu0 0.0
  %68 = vmatpush1.msra.mxu0 0.0
  %69 = vmatprep.subr.mxu0 0.0
  %70 = vmatpush1.msra.mxu0 0.0
  %71 = vmatprep.subr.mxu0 0.0
  %72 = vmatpush1.msra.mxu0 0.0
  %73 = vmatprep.subr.mxu0 0.0
  %74 = vmatpush1.msra.mxu0 0.0
  %75 = vmatprep.subr.mxu0 0.0
  %76 = vmatpush1.msra.mxu0 0.0
  %77 = vmatprep.subr.mxu0 0.0
  %78 = vmatpush1.msra.mxu0 0.0
  %79 = vmatprep.subr.mxu0 0.0
  %80 = vmatpush1.msra.mxu0 0.0
  %81 = vmatprep.subr.mxu0 0.0
  %82 = vmatpush1.msra.mxu0 0.0
  %83 = vmatprep.subr.mxu0 0.0
  %84 = vmatpush1.msra.mxu0 0.0
  %85 = vmatprep.subr.mxu0 0.0
  %86 = vmatpush1.msra.mxu0 0.0
  %87 = vmatprep.subr.mxu0 0.0
  %88 = vmatpush1.msra.mxu0 0.0
  %89 = vmatprep.subr.mxu0 0.0
  %90 = vmatpush1.msra.mxu0 0.0
  %91 = vmatprep.subr.mxu0 0.0
  %92 = vmatpush1.msra.mxu0 0.0
  %93 = vmatprep.subr.mxu0 0.0
  %94 = vmatpush1.msra.mxu0 0.0
  %95 = vmatprep.subr.mxu0 0.0
  %96 = vmatpush1.msra.mxu0 0.0
  %97 = vmatprep.mubr.f32.mxu0 0.0
  %98 = vmatmul.mubr.f32.gmra.mrb[0].mxu0 %v28
  %v99 = vpop.f32.mrb[0].mxu0
  %v100 = vadd.f32 0.0, %v99
  %v101 = vpop.f32.mrb[0].mxu0
  %102 = vmatprep.mubr.f32.mxu0 0.0
  %103 = vmatmul.mubr.f32.gmra.mrb[0].mxu0 %v31
  %v104 = vpop.f32.mrb[0].mxu0
  %v105 = vadd.f32 0.0, %v104
  %v106 = vpop.f32.mrb[0].mxu0
  %107 = vdwg.mxu0
  %vm108 = vcmask 130048
  %109 = vst.msk [vmem:[%s2] sm:$0xff] %vm108, %v100
  %110 = vst.msk [vmem:[%s2 + $0x8] sm:$0xff] %vm108, %v105
  %v111 = vsel %vm108, %v100, -inf
  %112 = vmax.xlane.f32.xlu0 %v111
  %v113 = vpop.xlane.xlu0 %112
  %v114 = vsel %vm108, %v105, -inf
  %115 = vmax.xlane.f32.xlu0 %v114
  %v116 = vpop.xlane.xlu0 %115
  %v117 = vsub.f32 %v100, %v113
  %v118 = vsub.f32 %v105, %v116
  %v119 = vmul.f32 %v117, 1.442695
  %v120 = vpow.pop %v119
  %v121 = vmul.f32 %v118, 1.442695
  %v122 = vpow.pop %v121
  %v123 = vsel %vm108, %v120, 0.0
  %124 = vadd.xlane.f32.xlu0 %v123
  %v125 = vpop.xlane.xlu0 %124
  %v126 = vsel %vm108, %v122, 0.0
  %127 = vadd.xlane.f32.xlu0 %v126
  %v128 = vpop.xlane.xlu0 %127
  %v129 = vsel %vm18, %v120, 0.0
  %v130 = vsel %vm19, %v122, 0.0
  %v131 = vsel %vm108, %v129, 0.0
  %132 = vadd.xlane.f32.xlu0 %v131
  %v133 = vpop.xlane.xlu0 %132
  %v134 = vsel %vm108, %v130, 0.0
  %135 = vadd.xlane.f32.xlu0 %v134
  %v136 = vpop.xlane.xlu0 %135
  %v137 = vrcp.pop %v125
  %v138 = vmul.f32 %v133, %v137
  %v139 = vrcp.pop %v128
  %v140 = vmul.f32 %v136, %v139
  %vm141 = vcmask 7168
  %142 = vst.msk [vmem:[%s3] sm:$0xff] %vm141, %v138
  %143 = vst.msk [vmem:[%s3 + $0x8] sm:$0xff] %vm141, %v140
  %s144 = scalar_lea.vmem %s0, 16
  %v145 = vld [vmem:[%s144] sm:$0xff]
  %v146 = vld [vmem:[%s144 + $0x8] sm:$0xff]
  %s147 = scalar_lea.vmem %s1, 32
  %v148 = vld [vmem:[%s147] sm:$0xff]
  %v149 = vld [vmem:[%s147 + $0x8] sm:$0xff]
  %v150 = vld [vmem:[%s147 + $0x10] sm:$0xff]
  %v151 = vld [vmem:[%s147 + $0x18] sm:$0xff]
  %v153 = vsel %vm26, %v145, 0
  %v156 = vsel %vm26, %v146, 0
  %158 = vmatprep.subr.mxu0 0.0
  %159 = vmatpush1.msra.mxu0 %v148
  %160 = vmatprep.subr.mxu0 0.0
  %161 = vmatpush1.msra.mxu0 %v149
  %162 = vmatprep.subr.mxu0 0.0
  %163 = vmatpush1.msra.mxu0 %v150
  %164 = vmatprep.subr.mxu0 0.0
  %165 = vmatpush1.msra.mxu0 %v151
  %166 = vmatprep.subr.mxu0 0.0
  %167 = vmatpush1.msra.mxu0 0.0
  %168 = vmatprep.subr.mxu0 0.0
  %169 = vmatpush1.msra.mxu0 0.0
  %170 = vmatprep.subr.mxu0 0.0
  %171 = vmatpush1.msra.mxu0 0.0
  %172 = vmatprep.subr.mxu0 0.0
  %173 = vmatpush1.msra.mxu0 0.0
  %174 = vmatprep.subr.mxu0 0.0
  %175 = vmatpush1.msra.mxu0 0.0
  %176 = vmatprep.subr.mxu0 0.0
  %177 = vmatpush1.msra.mxu0 0.0
  %178 = vmatprep.subr.mxu0 0.0
  %179 = vmatpush1.msra.mxu0 0.0
  %180 = vmatprep.subr.mxu0 0.0
  %181 = vmatpush1.msra.mxu0 0.0
  %182 = vmatprep.subr.mxu0 0.0
  %183 = vmatpush1.msra.mxu0 0.0
  %184 = vmatprep.subr.mxu0 0.0
  %185 = vmatpush1.msra.mxu0 0.0
  %186 = vmatprep.subr.mxu0 0.0
  %187 = vmatpush1.msra.mxu0 0.0
  %188 = vmatprep.subr.mxu0 0.0
  %189 = vmatpush1.msra.mxu0 0.0
  %190 = vmatprep.subr.mxu0 0.0
  %191 = vmatpush1.msra.mxu0 0.0
  %192 = vmatprep.subr.mxu0 0.0
  %193 = vmatpush1.msra.mxu0 0.0
  %194 = vmatprep.subr.mxu0 0.0
  %195 = vmatpush1.msra.mxu0 0.0
  %196 = vmatprep.subr.mxu0 0.0
  %197 = vmatpush1.msra.mxu0 0.0
  %198 = vmatprep.subr.mxu0 0.0
  %199 = vmatpush1.msra.mxu0 0.0
  %200 = vmatprep.subr.mxu0 0.0
  %201 = vmatpush1.msra.mxu0 0.0
  %202 = vmatprep.subr.mxu0 0.0
  %203 = vmatpush1.msra.mxu0 0.0
  %204 = vmatprep.subr.mxu0 0.0
  %205 = vmatpush1.msra.mxu0 0.0
  %206 = vmatprep.subr.mxu0 0.0
  %207 = vmatpush1.msra.mxu0 0.0
  %208 = vmatprep.subr.mxu0 0.0
  %209 = vmatpush1.msra.mxu0 0.0
  %210 = vmatprep.subr.mxu0 0.0
  %211 = vmatpush1.msra.mxu0 0.0
  %212 = vmatprep.subr.mxu0 0.0
  %213 = vmatpush1.msra.mxu0 0.0
  %214 = vmatprep.subr.mxu0 0.0
  %215 = vmatpush1.msra.mxu0 0.0
  %216 = vmatprep.subr.mxu0 0.0
  %217 = vmatpush1.msra.mxu0 0.0
  %218 = vmatprep.subr.mxu0 0.0
  %219 = vmatpush1.msra.mxu0 0.0
  %220 = vmatprep.subr.mxu0 0.0
  %221 = vmatpush1.msra.mxu0 0.0
  %222 = vmatprep.mubr.f32.mxu0 0.0
  %223 = vmatmul.mubr.f32.gmra.mrb[0].mxu0 %v153
  %v224 = vpop.f32.mrb[0].mxu0
  %v225 = vadd.f32 0.0, %v224
  %v226 = vpop.f32.mrb[0].mxu0
  %227 = vmatprep.mubr.f32.mxu0 0.0
  %228 = vmatmul.mubr.f32.gmra.mrb[0].mxu0 %v156
  %v229 = vpop.f32.mrb[0].mxu0
  %v230 = vadd.f32 0.0, %v229
  %v231 = vpop.f32.mrb[0].mxu0
  %232 = vdwg.mxu0
  %s233 = scalar_lea.vmem %s2, 16
  %234 = vst.msk [vmem:[%s233] sm:$0xff] %vm108, %v225
  %235 = vst.msk [vmem:[%s233 + $0x8] sm:$0xff] %vm108, %v230
  %v236 = vsel %vm108, %v225, -inf
  %237 = vmax.xlane.f32.xlu0 %v236
  %v238 = vpop.xlane.xlu0 %237
  %v239 = vsel %vm108, %v230, -inf
  %240 = vmax.xlane.f32.xlu0 %v239
  %v241 = vpop.xlane.xlu0 %240
  %v242 = vsub.f32 %v225, %v238
  %v243 = vsub.f32 %v230, %v241
  %v244 = vmul.f32 %v242, 1.442695
  %v245 = vpow.pop %v244
  %v246 = vmul.f32 %v243, 1.442695
  %v247 = vpow.pop %v246
  %v248 = vsel %vm108, %v245, 0.0
  %249 = vadd.xlane.f32.xlu0 %v248
  %v250 = vpop.xlane.xlu0 %249
  %v251 = vsel %vm108, %v247, 0.0
  %252 = vadd.xlane.f32.xlu0 %v251
  %v253 = vpop.xlane.xlu0 %252
  %v254 = vsel %vm18, %v245, 0.0
  %v255 = vsel %vm19, %v247, 0.0
  %v256 = vsel %vm108, %v254, 0.0
  %257 = vadd.xlane.f32.xlu0 %v256
  %v258 = vpop.xlane.xlu0 %257
  %v259 = vsel %vm108, %v255, 0.0
  %260 = vadd.xlane.f32.xlu0 %v259
  %v261 = vpop.xlane.xlu0 %260
  %v262 = vrcp.pop %v250
  %v263 = vmul.f32 %v258, %v262
  %v264 = vrcp.pop %v253
  %v265 = vmul.f32 %v261, %v264
  %s266 = scalar_lea.vmem %s3, 16
  %267 = vst.msk [vmem:[%s266] sm:$0xff] %vm141, %v263
  %268 = vst.msk [vmem:[%s266 + $0x8] sm:$0xff] %vm141, %v265
  // Predicated region
  $region10: #{relationship_attention.2} parent=0 // pred_check
    _
  $region11: #{relationship_attention.2} parent=0 // pred_check_branch
    %270 = sbr.rel (0) target = $region13
  $region12: #{relationship_attention.2} parent=0 // pred_region
    _
  $region13: #{relationship_attention.2} parent=0 // pred_fallthru
    _
  // Predicated region
  $region14: #{relationship_attention.2} parent=0 // pred_check
    _
  $region15: #{relationship_attention.2} parent=0 // pred_check_branch
    %272 = sbr.rel (0) target = $region17
  $region16: #{relationship_attention.2} parent=0 // pred_region
    _
  $region17: #{relationship_attention.2} parent=0 // pred_fallthru
    _
  // Predicated region
  $region18: #{relationship_attention.2} parent=0 // pred_check
    _
  $region19: #{relationship_attention.2} parent=0 // pred_check_branch
    %274 = sbr.rel (0) target = $region21
  $region20: #{relationship_attention.2} parent=0 // pred_region
    _
  $region21: #{relationship_attention.2} parent=0 // pred_fallthru
    _
  // Predicated region
  $region22: #{relationship_attention.2} parent=0 // pred_check
    _
  $region23: #{relationship_attention.2} parent=0 // pred_check_branch
    %276 = sbr.rel (0) target = $region25
  $region24: #{relationship_attention.2} parent=0 // pred_region
    _
  $region25: #{relationship_attention.2} parent=0 // pred_fallthru
    _

// kernel: relationship_attention.3
$region0: #{relationship_attention.3}
  #allocation0 [shape = 'u32[]', space=smem, size = 0x4, offset = 0x4, fixed_abs, tag = 'smem constant byte address 0x4 - core index']
  #allocation1 [shape = 'u32[144,128]{1,0:T(1,128)}', space=vmem, size = 0x12000, scoped, tag = 'internal scratch']
  #allocation2 [shape = 's32[1]{0}', space=sflag, size = 0x4, scoped, tag = 'scoped memory for relationship_attention.3']
  #allocation3 [shape = 'u8[512]{0}', space=smem, size = 0x200, scoped, tag = 'prefetched SMEM operand 0']
  #allocation4 [shape = 'u8[512]{0}', space=smem, size = 0x200, scoped, tag = 'prefetched SMEM operand 1']
  %s0 = inlined_call_operand.vmem [shape: s32[64], index: 0, kind: input, shape index: {}]
  %s1 = inlined_call_operand.vmem [shape: s32[64], index: 1, kind: input, shape index: {}]
  %s2 = inlined_call_operand.vmem [shape: f32[32,32], index: 2, kind: input, shape index: {}]
  %s3 = inlined_call_operand.hbm [shape: f32[64,32], index: 3, kind: output, shape index: {}]
  %s4 = sld [smem:[#allocation0]]
  $region14: #{relationship_attention.3} parent=0
    _
  %s6 = ssub.s32 1, %s4
  %s7 = scalar_select 0, %s6, %s4
  %s8 = sshll.u32 %s0, 4
  %s9 = int_to_ptr.vmem [resolvable:$true] %s8
  %11 = dma.vmem_to_smem %s9, 16, [#allocation3], [#allocation2]
  %s12 = sshll.u32 %s1, 4
  %s13 = int_to_ptr.vmem [resolvable:$true] %s12
  %15 = dma.vmem_to_smem %s13, 16, [#allocation4], [#allocation2]
  %16 = dma.done [#allocation2], 32
  %17 = sfence
  $region1: #{relationship_attention.3} parent=0
    #allocation5 [shape = 'u8[32768]{0}', space=vmem, size = 0x8000, scoped, tag = 'output window, operand 0, single buffered']
    #allocation6 [shape = 's32[1]{0}', space=sflag, size = 0x4, scoped, tag = 'scoped memory for relationship_attention.3']
    %18 = vsyncpa [#allocation6], 0
    // Predicated region
    $region2: #{relationship_attention.3} parent=1 // pred_check
      _
    $region3: #{relationship_attention.3} parent=1 // pred_check_branch
      %20 = sbr.rel (0) target = $region5
    $region4: #{relationship_attention.3} parent=1 // pred_region
      _
    $region5: #{relationship_attention.3} parent=1 // pred_fallthru
      _
    %s21 = sld [smem:[#allocation3]]
    %s22 = scalar_lea.vmem %s2, %s21
    %v23 = vld [vmem:[%s22] sm:$0x1]
    %s24 = sld [smem:[#allocation4]]
    %s25 = scalar_lea.vmem %s2, %s24
    %v26 = vld [vmem:[%s25] sm:$0x1]
    %v27 = vadd.f32 %v23, %v26
    %vm28 = vcmask 253952
    %29 = vst.msk [vmem:[#allocation5] sm:$0x1] %vm28, %v27
    %s30 = sld [smem:[#allocation3 + $0x1]]
    %s31 = scalar_lea.vmem %s2, %s30
    %v32 = vld [vmem:[%s31] sm:$0x1]
    %s33 = sld [smem:[#allocation4 + $0x1]]
    %s34 = scalar_lea.vmem %s2, %s33
    %v35 = vld [vmem:[%s34] sm:$0x1]
    %v36 = vadd.f32 %v32, %v35
    %37 = vst.msk [vmem:[#allocation5 + $0x1] sm:$0x1] %vm28, %v36
    %s38 = sld [smem:[#allocation3 + $0x2]]
    %s39 = scalar_lea.vmem %s2, %s38
    %v40 = vld [vmem:[%s39] sm:$0x1]
    %s41 = sld [smem:[#allocation4 + $0x2]]
    %s42 = scalar_lea.vmem %s2, %s41
    %v43 = vld [vmem:[%s42] sm:$0x1]
    %v44 = vadd.f32 %v40, %v43
    %45 = vst.msk [vmem:[#allocation5 + $0x2] sm:$0x1] %vm28, %v44
    %s46 = sld [smem:[#allocation3 + $0x3]]
    %s47 = scalar_lea.vmem %s2, %s46
    %v48 = vld [vmem:[%s47] sm:$0x1]
    %s49 = sld [smem:[#allocation4 + $0x3]]
    %s50 = scalar_lea.vmem %s2, %s49
    %v51 = vld [vmem:[%s50] sm:$0x1]
    %v52 = vadd.f32 %v48, %v51
    %53 = vst.msk [vmem:[#allocation5 + $0x3] sm:$0x1] %vm28, %v52
    %s54 = sld [smem:[#allocation3 + $0x4]]
    %s55 = scalar_lea.vmem %s2, %s54
    %v56 = vld [vmem:[%s55] sm:$0x1]
    %s57 = sld [smem:[#allocation4 + $0x4]]
    %s58 = scalar_lea.vmem %s2, %s57
    %v59 = vld [vmem:[%s58] sm:$0x1]
    %v60 = vadd.f32 %v56, %v59
    %61 = vst.msk [vmem:[#allocation5 + $0x4] sm:$0x1] %vm28, %v60
    %s62 = sld [smem:[#allocation3 + $0x5]]
    %s63 = scalar_lea.vmem %s2, %s62
    %v64 = vld [vmem:[%s63] sm:$0x1]
    %s65 = sld [smem:[#allocation4 + $0x5]]
    %s66 = scalar_lea.vmem %s2, %s65
    %v67 = vld [vmem:[%s66] sm:$0x1]
    %v68 = vadd.f32 %v64, %v67
    %69 = vst.msk [vmem:[#allocation5 + $0x5] sm:$0x1] %vm28, %v68
    %s70 = sld [smem:[#allocation3 + $0x6]]
    %s71 = scalar_lea.vmem %s2, %s70
    %v72 = vld [vmem:[%s71] sm:$0x1]
    %s73 = sld [smem:[#allocation4 + $0x6]]
    %s74 = scalar_lea.vmem %s2, %s73
    %v75 = vld [vmem:[%s74] sm:$0x1]
    %v76 = vadd.f32 %v72, %v75
    %77 = vst.msk [vmem:[#allocation5 + $0x6] sm:$0x1] %vm28, %v76
    %s78 = sld [smem:[#allocation3 + $0x7]]
    %s79 = scalar_lea.vmem %s2, %s78
    %v80 = vld [vmem:[%s79] sm:$0x1]
    %s81 = sld [smem:[#allocation4 + $0x7]]
    %s82 = scalar_lea.vmem %s2, %s81
    %v83 = vld [vmem:[%s82] sm:$0x1]
    %v84 = vadd.f32 %v80, %v83
    %85 = vst.msk [vmem:[#allocation5 + $0x7] sm:$0x1] %vm28, %v84
    %s86 = sld [smem:[#allocation3 + $0x8]]
    %s87 = scalar_lea.vmem %s2, %s86
    %v88 = vld [vmem:[%s87] sm:$0x1]
    %s89 = sld [smem:[#allocation4 + $0x8]]
    %s90 = scalar_lea.vmem %s2, %s89
    %v91 = vld [vmem:[%s90] sm:$0x1]
    %v92 = vadd.f32 %v88, %v91
    %93 = vst.msk [vmem:[#allocation5 + $0x8] sm:$0x1] %vm28, %v92
    %s94 = sld [smem:[#allocation3 + $0x9]]
    %s95 = scalar_lea.vmem %s2, %s94
    %v96 = vld [vmem:[%s95] sm:$0x1]
    %s97 = sld [smem:[#allocation4 + $0x9]]
    %s98 = scalar_lea.vmem %s2, %s97
    %v99 = vld [vmem:[%s98] sm:$0x1]
    %v100 = vadd.f32 %v96, %v99
    %101 = vst.msk [vmem:[#allocation5 + $0x9] sm:$0x1] %vm28, %v100
    %s102 = sld [smem:[#allocation3 + $0xa]]
    %s103 = scalar_lea.vmem %s2, %s102
    %v104 = vld [vmem:[%s103] sm:$0x1]
    %s105 = sld [smem:[#allocation4 + $0xa]]
    %s106 = scalar_lea.vmem %s2, %s105
    %v107 = vld [vmem:[%s106] sm:$0x1]
    %v108 = vadd.f32 %v104, %v107
    %109 = vst.msk [vmem:[#allocation5 + $0xa] sm:$0x1] %vm28, %v108
    %s110 = sld [smem:[#allocation3 + $0xb]]
    %s111 = scalar_lea.vmem %s2, %s110
    %v112 = vld [vmem:[%s111] sm:$0x1]
    %s113 = sld [smem:[#allocation4 + $0xb]]
    %s114 = scalar_lea.vmem %s2, %s113
    %v115 = vld [vmem:[%s114] sm:$0x1]
    %v116 = vadd.f32 %v112, %v115
    %117 = vst.msk [vmem:[#allocation5 + $0xb] sm:$0x1] %vm28, %v116
    %s118 = sld [smem:[#allocation3 + $0xc]]
    %s119 = scalar_lea.vmem %s2, %s118
    %v120 = vld [vmem:[%s119] sm:$0x1]
    %s121 = sld [smem:[#allocation4 + $0xc]]
    %s122 = scalar_lea.vmem %s2, %s121
    %v123 = vld [vmem:[%s122] sm:$0x1]
    %v124 = vadd.f32 %v120, %v123
    %125 = vst.msk [vmem:[#allocation5 + $0xc] sm:$0x1] %vm28, %v124
    %s126 = sld [smem:[#allocation3 + $0xd]]
    %s127 = scalar_lea.vmem %s2, %s126
    %v128 = vld [vmem:[%s127] sm:$0x1]
    %s129 = sld [smem:[#allocation4 + $0xd]]
    %s130 = scalar_lea.vmem %s2, %s129
    %v131 = vld [vmem:[%s130] sm:$0x1]
    %v132 = vadd.f32 %v128, %v131
    %133 = vst.msk [vmem:[#allocation5 + $0xd] sm:$0x1] %vm28, %v132
    %s134 = sld [smem:[#allocation3 + $0xe]]
    %s135 = scalar_lea.vmem %s2, %s134
    %v136 = vld [vmem:[%s135] sm:$0x1]
    %s137 = sld [smem:[#allocation4 + $0xe]]
    %s138 = scalar_lea.vmem %s2, %s137
    %v139 = vld [vmem:[%s138] sm:$0x1]
    %v140 = vadd.f32 %v136, %v139
    %141 = vst.msk [vmem:[#allocation5 + $0xe] sm:$0x1] %vm28, %v140
    %s142 = sld [smem:[#allocation3 + $0xf]]
    %s143 = scalar_lea.vmem %s2, %s142
    %v144 = vld [vmem:[%s143] sm:$0x1]
    %s145 = sld [smem:[#allocation4 + $0xf]]
    %s146 = scalar_lea.vmem %s2, %s145
    %v147 = vld [vmem:[%s146] sm:$0x1]
    %v148 = vadd.f32 %v144, %v147
    %149 = vst.msk [vmem:[#allocation5 + $0xf] sm:$0x1] %vm28, %v148
    %s150 = sld [smem:[#allocation3 + $0x10]]
    %s151 = scalar_lea.vmem %s2, %s150
    %v152 = vld [vmem:[%s151] sm:$0x1]
    %s153 = sld [smem:[#allocation4 + $0x10]]
    %s154 = scalar_lea.vmem %s2, %s153
    %v155 = vld [vmem:[%s154] sm:$0x1]
    %v156 = vadd.f32 %v152, %v155
    %157 = vst.msk [vmem:[#allocation5 + $0x10] sm:$0x1] %vm28, %v156
    %s158 = sld [smem:[#allocation3 + $0x11]]
    %s159 = scalar_lea.vmem %s2, %s158
    %v160 = vld [vmem:[%s159] sm:$0x1]
    %s161 = sld [smem:[#allocation4 + $0x11]]
    %s162 = scalar_lea.vmem %s2, %s161
    %v163 = vld [vmem:[%s162] sm:$0x1]
    %v164 = vadd.f32 %v160, %v163
    %165 = vst.msk [vmem:[#allocation5 + $0x11] sm:$0x1] %vm28, %v164
    %s166 = sld [smem:[#allocation3 + $0x12]]
    %s167 = scalar_lea.vmem %s2, %s166
    %v168 = vld [vmem:[%s167] sm:$0x1]
    %s169 = sld [smem:[#allocation4 + $0x12]]
    %s170 = scalar_lea.vmem %s2, %s169
    %v171 = vld [vmem:[%s170] sm:$0x1]
    %v172 = vadd.f32 %v168, %v171
    %173 = vst.msk [vmem:[#allocation5 + $0x12] sm:$0x1] %vm28, %v172
    %s174 = sld [smem:[#allocation3 + $0x13]]
    %s175 = scalar_lea.vmem %s2, %s174
    %v176 = vld [vmem:[%s175] sm:$0x1]
    %s177 = sld [smem:[#allocation4 + $0x13]]
    %s178 = scalar_lea.vmem %s2, %s177
    %v179 = vld [vmem:[%s178] sm:$0x1]
    %v180 = vadd.f32 %v176, %v179
    %181 = vst.msk [vmem:[#allocation5 + $0x13] sm:$0x1] %vm28, %v180
    %s182 = sld [smem:[#allocation3 + $0x14]]
    %s183 = scalar_lea.vmem %s2, %s182
    %v184 = vld [vmem:[%s183] sm:$0x1]
    %s185 = sld [smem:[#allocation4 + $0x14]]
    %s186 = scalar_lea.vmem %s2, %s185
    %v187 = vld [vmem:[%s186] sm:$0x1]
    %v188 = vadd.f32 %v184, %v187
    %189 = vst.msk [vmem:[#allocation5 + $0x14] sm:$0x1] %vm28, %v188
    %s190 = sld [smem:[#allocation3 + $0x15]]
    %s191 = scalar_lea.vmem %s2, %s190
    %v192 = vld [vmem:[%s191] sm:$0x1]
    %s193 = sld [smem:[#allocation4 + $0x15]]
    %s194 = scalar_lea.vmem %s2, %s193
    %v195 = vld [vmem:[%s194] sm:$0x1]
    %v196 = vadd.f32 %v192, %v195
    %197 = vst.msk [vmem:[#allocation5 + $0x15] sm:$0x1] %vm28, %v196
    %s198 = sld [smem:[#allocation3 + $0x16]]
    %s199 = scalar_lea.vmem %s2, %s198
    %v200 = vld [vmem:[%s199] sm:$0x1]
    %s201 = sld [smem:[#allocation4 + $0x16]]
    %s202 = scalar_lea.vmem %s2, %s201
    %v203 = vld [vmem:[%s202] sm:$0x1]
    %v204 = vadd.f32 %v200, %v203
    %205 = vst.msk [vmem:[#allocation5 + $0x16] sm:$0x1] %vm28, %v204
    %s206 = sld [smem:[#allocation3 + $0x17]]
    %s207 = scalar_lea.vmem %s2, %s206
    %v208 = vld [vmem:[%s207] sm:$0x1]
    %s209 = sld [smem:[#allocation4 + $0x17]]
    %s210 = scalar_lea.vmem %s2, %s209
    %v211 = vld [vmem:[%s210] sm:$0x1]
    %v212 = vadd.f32 %v208, %v211
    %213 = vst.msk [vmem:[#allocation5 + $0x17] sm:$0x1] %vm28, %v212
    %s214 = sld [smem:[#allocation3 + $0x18]]
    %s215 = scalar_lea.vmem %s2, %s214
    %v216 = vld [vmem:[%s215] sm:$0x1]
    %s217 = sld [smem:[#allocation4 + $0x18]]
    %s218 = scalar_lea.vmem %s2, %s217
    %v219 = vld [vmem:[%s218] sm:$0x1]
    %v220 = vadd.f32 %v216, %v219
    %221 = vst.msk [vmem:[#allocation5 + $0x18] sm:$0x1] %vm28, %v220
    %s222 = sld [smem:[#allocation3 + $0x19]]
    %s223 = scalar_lea.vmem %s2, %s222
    %v224 = vld [vmem:[%s223] sm:$0x1]
    %s225 = sld [smem:[#allocation4 + $0x19]]
    %s226 = scalar_lea.vmem %s2, %s225
    %v227 = vld [vmem:[%s226] sm:$0x1]
    %v228 = vadd.f32 %v224, %v227
    %229 = vst.msk [vmem:[#allocation5 + $0x19] sm:$0x1] %vm28, %v228
    %s230 = sld [smem:[#allocation3 + $0x1a]]
    %s231 = scalar_lea.vmem %s2, %s230
    %v232 = vld [vmem:[%s231] sm:$0x1]
    %s233 = sld [smem:[#allocation4 + $0x1a]]
    %s234 = scalar_lea.vmem %s2, %s233
    %v235 = vld [vmem:[%s234] sm:$0x1]
    %v236 = vadd.f32 %v232, %v235
    %237 = vst.msk [vmem:[#allocation5 + $0x1a] sm:$0x1] %vm28, %v236
    %s238 = sld [smem:[#allocation3 + $0x1b]]
    %s239 = scalar_lea.vmem %s2, %s238
    %v240 = vld [vmem:[%s239] sm:$0x1]
    %s241 = sld [smem:[#allocation4 + $0x1b]]
    %s242 = scalar_lea.vmem %s2, %s241
    %v243 = vld [vmem:[%s242] sm:$0x1]
    %v244 = vadd.f32 %v240, %v243
    %245 = vst.msk [vmem:[#allocation5 + $0x1b] sm:$0x1] %vm28, %v244
    %s246 = sld [smem:[#allocation3 + $0x1c]]
    %s247 = scalar_lea.vmem %s2, %s246
    %v248 = vld [vmem:[%s247] sm:$0x1]
    %s249 = sld [smem:[#allocation4 + $0x1c]]
    %s250 = scalar_lea.vmem %s2, %s249
    %v251 = vld [vmem:[%s250] sm:$0x1]
    %v252 = vadd.f32 %v248, %v251
    %253 = vst.msk [vmem:[#allocation5 + $0x1c] sm:$0x1] %vm28, %v252
    %s254 = sld [smem:[#allocation3 + $0x1d]]
    %s255 = scalar_lea.vmem %s2, %s254
    %v256 = vld [vmem:[%s255] sm:$0x1]
    %s257 = sld [smem:[#allocation4 + $0x1d]]
    %s258 = scalar_lea.vmem %s2, %s257
    %v259 = vld [vmem:[%s258] sm:$0x1]
    %v260 = vadd.f32 %v256, %v259
    %261 = vst.msk [vmem:[#allocation5 + $0x1d] sm:$0x1] %vm28, %v260
    %s262 = sld [smem:[#allocation3 + $0x1e]]
    %s263 = scalar_lea.vmem %s2, %s262
    %v264 = vld [vmem:[%s263] sm:$0x1]
    %s265 = sld [smem:[#allocation4 + $0x1e]]
    %s266 = scalar_lea.vmem %s2, %s265
    %v267 = vld [vmem:[%s266] sm:$0x1]
    %v268 = vadd.f32 %v264, %v267
    %269 = vst.msk [vmem:[#allocation5 + $0x1e] sm:$0x1] %vm28, %v268
    %s270 = sld [smem:[#allocation3 + $0x1f]]
    %s271 = scalar_lea.vmem %s2, %s270
    %v272 = vld [vmem:[%s271] sm:$0x1]
    %s273 = sld [smem:[#allocation4 + $0x1f]]
    %s274 = scalar_lea.vmem %s2, %s273
    %v275 = vld [vmem:[%s274] sm:$0x1]
    %v276 = vadd.f32 %v272, %v275
    %277 = vst.msk [vmem:[#allocation5 + $0x1f] sm:$0x1] %vm28, %v276
    %s278 = sld [smem:[#allocation3 + $0x20]]
    %s279 = scalar_lea.vmem %s2, %s278
    %v280 = vld [vmem:[%s279] sm:$0x1]
    %s281 = sld [smem:[#allocation4 + $0x20]]
    %s282 = scalar_lea.vmem %s2, %s281
    %v283 = vld [vmem:[%s282] sm:$0x1]
    %v284 = vadd.f32 %v280, %v283
    %285 = vst.msk [vmem:[#allocation5 + $0x20] sm:$0x1] %vm28, %v284
    %s286 = sld [smem:[#allocation3 + $0x21]]
    %s287 = scalar_lea.vmem %s2, %s286
    %v288 = vld [vmem:[%s287] sm:$0x1]
    %s289 = sld [smem:[#allocation4 + $0x21]]
    %s290 = scalar_lea.vmem %s2, %s289
    %v291 = vld [vmem:[%s290] sm:$0x1]
    %v292 = vadd.f32 %v288, %v291
    %293 = vst.msk [vmem:[#allocation5 + $0x21] sm:$0x1] %vm28, %v292
    %s294 = sld [smem:[#allocation3 + $0x22]]
    %s295 = scalar_lea.vmem %s2, %s294
    %v296 = vld [vmem:[%s295] sm:$0x1]
    %s297 = sld [smem:[#allocation4 + $0x22]]
    %s298 = scalar_lea.vmem %s2, %s297
    %v299 = vld [vmem:[%s298] sm:$0x1]
    %v300 = vadd.f32 %v296, %v299
    %301 = vst.msk [vmem:[#allocation5 + $0x22] sm:$0x1] %vm28, %v300
    %s302 = sld [smem:[#allocation3 + $0x23]]
    %s303 = scalar_lea.vmem %s2, %s302
    %v304 = vld [vmem:[%s303] sm:$0x1]
    %s305 = sld [smem:[#allocation4 + $0x23]]
    %s306 = scalar_lea.vmem %s2, %s305
    %v307 = vld [vmem:[%s306] sm:$0x1]
    %v308 = vadd.f32 %v304, %v307
    %309 = vst.msk [vmem:[#allocation5 + $0x23] sm:$0x1] %vm28, %v308
    %s310 = sld [smem:[#allocation3 + $0x24]]
    %s311 = scalar_lea.vmem %s2, %s310
    %v312 = vld [vmem:[%s311] sm:$0x1]
    %s313 = sld [smem:[#allocation4 + $0x24]]
    %s314 = scalar_lea.vmem %s2, %s313
    %v315 = vld [vmem:[%s314] sm:$0x1]
    %v316 = vadd.f32 %v312, %v315
    %317 = vst.msk [vmem:[#allocation5 + $0x24] sm:$0x1] %vm28, %v316
    %s318 = sld [smem:[#allocation3 + $0x25]]
    %s319 = scalar_lea.vmem %s2, %s318
    %v320 = vld [vmem:[%s319] sm:$0x1]
    %s321 = sld [smem:[#allocation4 + $0x25]]
    %s322 = scalar_lea.vmem %s2, %s321
    %v323 = vld [vmem:[%s322] sm:$0x1]
    %v324 = vadd.f32 %v320, %v323
    %325 = vst.msk [vmem:[#allocation5 + $0x25] sm:$0x1] %vm28, %v324
    %s326 = sld [smem:[#allocation3 + $0x26]]
    %s327 = scalar_lea.vmem %s2, %s326
    %v328 = vld [vmem:[%s327] sm:$0x1]
    %s329 = sld [smem:[#allocation4 + $0x26]]
    %s330 = scalar_lea.vmem %s2, %s329
    %v331 = vld [vmem:[%s330] sm:$0x1]
    %v332 = vadd.f32 %v328, %v331
    %333 = vst.msk [vmem:[#allocation5 + $0x26] sm:$0x1] %vm28, %v332
    %s334 = sld [smem:[#allocation3 + $0x27]]
    %s335 = scalar_lea.vmem %s2, %s334
    %v336 = vld [vmem:[%s335] sm:$0x1]
    %s337 = sld [smem:[#allocation4 + $0x27]]
    %s338 = scalar_lea.vmem %s2, %s337
    %v339 = vld [vmem:[%s338] sm:$0x1]
    %v340 = vadd.f32 %v336, %v339
    %341 = vst.msk [vmem:[#allocation5 + $0x27] sm:$0x1] %vm28, %v340
    %s342 = sld [smem:[#allocation3 + $0x28]]
    %s343 = scalar_lea.vmem %s2, %s342
    %v344 = vld [vmem:[%s343] sm:$0x1]
    %s345 = sld [smem:[#allocation4 + $0x28]]
    %s346 = scalar_lea.vmem %s2, %s345
    %v347 = vld [vmem:[%s346] sm:$0x1]
    %v348 = vadd.f32 %v344, %v347
    %349 = vst.msk [vmem:[#allocation5 + $0x28] sm:$0x1] %vm28, %v348
    %s350 = sld [smem:[#allocation3 + $0x29]]
    %s351 = scalar_lea.vmem %s2, %s350
    %v352 = vld [vmem:[%s351] sm:$0x1]
    %s353 = sld [smem:[#allocation4 + $0x29]]
    %s354 = scalar_lea.vmem %s2, %s353
    %v355 = vld [vmem:[%s354] sm:$0x1]
    %v356 = vadd.f32 %v352, %v355
    %357 = vst.msk [vmem:[#allocation5 + $0x29] sm:$0x1] %vm28, %v356
    %s358 = sld [smem:[#allocation3 + $0x2a]]
    %s359 = scalar_lea.vmem %s2, %s358
    %v360 = vld [vmem:[%s359] sm:$0x1]
    %s361 = sld [smem:[#allocation4 + $0x2a]]
    %s362 = scalar_lea.vmem %s2, %s361
    %v363 = vld [vmem:[%s362] sm:$0x1]
    %v364 = vadd.f32 %v360, %v363
    %365 = vst.msk [vmem:[#allocation5 + $0x2a] sm:$0x1] %vm28, %v364
    %s366 = sld [smem:[#allocation3 + $0x2b]]
    %s367 = scalar_lea.vmem %s2, %s366
    %v368 = vld [vmem:[%s367] sm:$0x1]
    %s369 = sld [smem:[#allocation4 + $0x2b]]
    %s370 = scalar_lea.vmem %s2, %s369
    %v371 = vld [vmem:[%s370] sm:$0x1]
    %v372 = vadd.f32 %v368, %v371
    %373 = vst.msk [vmem:[#allocation5 + $0x2b] sm:$0x1] %vm28, %v372
    %s374 = sld [smem:[#allocation3 + $0x2c]]
    %s375 = scalar_lea.vmem %s2, %s374
    %v376 = vld [vmem:[%s375] sm:$0x1]
    %s377 = sld [smem:[#allocation4 + $0x2c]]
    %s378 = scalar_lea.vmem %s2, %s377
    %v379 = vld [vmem:[%s378] sm:$0x1]
    %v380 = vadd.f32 %v376, %v379
    %381 = vst.msk [vmem:[#allocation5 + $0x2c] sm:$0x1] %vm28, %v380
    %s382 = sld [smem:[#allocation3 + $0x2d]]
    %s383 = scalar_lea.vmem %s2, %s382
    %v384 = vld [vmem:[%s383] sm:$0x1]
    %s385 = sld [smem:[#allocation4 + $0x2d]]
    %s386 = scalar_lea.vmem %s2, %s385
    %v387 = vld [vmem:[%s386] sm:$0x1]
    %v388 = vadd.f32 %v384, %v387
    %389 = vst.msk [vmem:[#allocation5 + $0x2d] sm:$0x1] %vm28, %v388
    %s390 = sld [smem:[#allocation3 + $0x2e]]
    %s391 = scalar_lea.vmem %s2, %s390
    %v392 = vld [vmem:[%s391] sm:$0x1]
    %s393 = sld [smem:[#allocation4 + $0x2e]]
    %s394 = scalar_lea.vmem %s2, %s393
    %v395 = vld [vmem:[%s394] sm:$0x1]
    %v396 = vadd.f32 %v392, %v395
    %397 = vst.msk [vmem:[#allocation5 + $0x2e] sm:$0x1] %vm28, %v396
    %s398 = sld [smem:[#allocation3 + $0x2f]]
    %s399 = scalar_lea.vmem %s2, %s398
    %v400 = vld [vmem:[%s399] sm:$0x1]
    %s401 = sld [smem:[#allocation4 + $0x2f]]
    %s402 = scalar_lea.vmem %s2, %s401
    %v403 = vld [vmem:[%s402] sm:$0x1]
    %v404 = vadd.f32 %v400, %v403
    %405 = vst.msk [vmem:[#allocation5 + $0x2f] sm:$0x1] %vm28, %v404
    %s406 = sld [smem:[#allocation3 + $0x30]]
    %s407 = scalar_lea.vmem %s2, %s406
    %v408 = vld [vmem:[%s407] sm:$0x1]
    %s409 = sld [smem:[#allocation4 + $0x30]]
    %s410 = scalar_lea.vmem %s2, %s409
    %v411 = vld [vmem:[%s410] sm:$0x1]
    %v412 = vadd.f32 %v408, %v411
    %413 = vst.msk [vmem:[#allocation5 + $0x30] sm:$0x1] %vm28, %v412
    %s414 = sld [smem:[#allocation3 + $0x31]]
    %s415 = scalar_lea.vmem %s2, %s414
    %v416 = vld [vmem:[%s415] sm:$0x1]
    %s417 = sld [smem:[#allocation4 + $0x31]]
    %s418 = scalar_lea.vmem %s2, %s417
    %v419 = vld [vmem:[%s418] sm:$0x1]
    %v420 = vadd.f32 %v416, %v419
    %421 = vst.msk [vmem:[#allocation5 + $0x31] sm:$0x1] %vm28, %v420
    %s422 = sld [smem:[#allocation3 + $0x32]]
    %s423 = scalar_lea.vmem %s2, %s422
    %v424 = vld [vmem:[%s423] sm:$0x1]
    %s425 = sld [smem:[#allocation4 + $0x32]]
    %s426 = scalar_lea.vmem %s2, %s425
    %v427 = vld [vmem:[%s426] sm:$0x1]
    %v428 = vadd.f32 %v424, %v427
    %429 = vst.msk [vmem:[#allocation5 + $0x32] sm:$0x1] %vm28, %v428
    %s430 = sld [smem:[#allocation3 + $0x33]]
    %s431 = scalar_lea.vmem %s2, %s430
    %v432 = vld [vmem:[%s431] sm:$0x1]
    %s433 = sld [smem:[#allocation4 + $0x33]]
    %s434 = scalar_lea.vmem %s2, %s433
    %v435 = vld [vmem:[%s434] sm:$0x1]
    %v436 = vadd.f32 %v432, %v435
    %437 = vst.msk [vmem:[#allocation5 + $0x33] sm:$0x1] %vm28, %v436
    %s438 = sld [smem:[#allocation3 + $0x34]]
    %s439 = scalar_lea.vmem %s2, %s438
    %v440 = vld [vmem:[%s439] sm:$0x1]
    %s441 = sld [smem:[#allocation4 + $0x34]]
    %s442 = scalar_lea.vmem %s2, %s441
    %v443 = vld [vmem:[%s442] sm:$0x1]
    %v444 = vadd.f32 %v440, %v443
    %445 = vst.msk [vmem:[#allocation5 + $0x34] sm:$0x1] %vm28, %v444
    %s446 = sld [smem:[#allocation3 + $0x35]]
    %s447 = scalar_lea.vmem %s2, %s446
    %v448 = vld [vmem:[%s447] sm:$0x1]
    %s449 = sld [smem:[#allocation4 + $0x35]]
    %s450 = scalar_lea.vmem %s2, %s449
    %v451 = vld [vmem:[%s450] sm:$0x1]
    %v452 = vadd.f32 %v448, %v451
    %453 = vst.msk [vmem:[#allocation5 + $0x35] sm:$0x1] %vm28, %v452
    %s454 = sld [smem:[#allocation3 + $0x36]]
    %s455 = scalar_lea.vmem %s2, %s454
    %v456 = vld [vmem:[%s455] sm:$0x1]
    %s457 = sld [smem:[#allocation4 + $0x36]]
    %s458 = scalar_lea.vmem %s2, %s457
    %v459 = vld [vmem:[%s458] sm:$0x1]
    %v460 = vadd.f32 %v456, %v459
    %461 = vst.msk [vmem:[#allocation5 + $0x36] sm:$0x1] %vm28, %v460
    %s462 = sld [smem:[#allocation3 + $0x37]]
    %s463 = scalar_lea.vmem %s2, %s462
    %v464 = vld [vmem:[%s463] sm:$0x1]
    %s465 = sld [smem:[#allocation4 + $0x37]]
    %s466 = scalar_lea.vmem %s2, %s465
    %v467 = vld [vmem:[%s466] sm:$0x1]
    %v468 = vadd.f32 %v464, %v467
    %469 = vst.msk [vmem:[#allocation5 + $0x37] sm:$0x1] %vm28, %v468
    %s470 = sld [smem:[#allocation3 + $0x38]]
    %s471 = scalar_lea.vmem %s2, %s470
    %v472 = vld [vmem:[%s471] sm:$0x1]
    %s473 = sld [smem:[#allocation4 + $0x38]]
    %s474 = scalar_lea.vmem %s2, %s473
    %v475 = vld [vmem:[%s474] sm:$0x1]
    %v476 = vadd.f32 %v472, %v475
    %477 = vst.msk [vmem:[#allocation5 + $0x38] sm:$0x1] %vm28, %v476
    %s478 = sld [smem:[#allocation3 + $0x39]]
    %s479 = scalar_lea.vmem %s2, %s478
    %v480 = vld [vmem:[%s479] sm:$0x1]
    %s481 = sld [smem:[#allocation4 + $0x39]]
    %s482 = scalar_lea.vmem %s2, %s481
    %v483 = vld [vmem:[%s482] sm:$0x1]
    %v484 = vadd.f32 %v480, %v483
    %485 = vst.msk [vmem:[#allocation5 + $0x39] sm:$0x1] %vm28, %v484
    %s486 = sld [smem:[#allocation3 + $0x3a]]
    %s487 = scalar_lea.vmem %s2, %s486
    %v488 = vld [vmem:[%s487] sm:$0x1]
    %s489 = sld [smem:[#allocation4 + $0x3a]]
    %s490 = scalar_lea.vmem %s2, %s489
    %v491 = vld [vmem:[%s490] sm:$0x1]
    %v492 = vadd.f32 %v488, %v491
    %493 = vst.msk [vmem:[#allocation5 + $0x3a] sm:$0x1] %vm28, %v492
    %s494 = sld [smem:[#allocation3 + $0x3b]]
    %s495 = scalar_lea.vmem %s2, %s494
    %v496 = vld [vmem:[%s495] sm:$0x1]
    %s497 = sld [smem:[#allocation4 + $0x3b]]
    %s498 = scalar_lea.vmem %s2, %s497
    %v499 = vld [vmem:[%s498] sm:$0x1]
    %v500 = vadd.f32 %v496, %v499
    %501 = vst.msk [vmem:[#allocation5 + $0x3b] sm:$0x1] %vm28, %v500
    %s502 = sld [smem:[#allocation3 + $0x3c]]
    %s503 = scalar_lea.vmem %s2, %s502
    %v504 = vld [vmem:[%s503] sm:$0x1]
    %s505 = sld [smem:[#allocation4 + $0x3c]]
    %s506 = scalar_lea.vmem %s2, %s505
    %v507 = vld [vmem:[%s506] sm:$0x1]
    %v508 = vadd.f32 %v504, %v507
    %509 = vst.msk [vmem:[#allocation5 + $0x3c] sm:$0x1] %vm28, %v508
    %s510 = sld [smem:[#allocation3 + $0x3d]]
    %s511 = scalar_lea.vmem %s2, %s510
    %v512 = vld [vmem:[%s511] sm:$0x1]
    %s513 = sld [smem:[#allocation4 + $0x3d]]
    %s514 = scalar_lea.vmem %s2, %s513
    %v515 = vld [vmem:[%s514] sm:$0x1]
    %v516 = vadd.f32 %v512, %v515
    %517 = vst.msk [vmem:[#allocation5 + $0x3d] sm:$0x1] %vm28, %v516
    %s518 = sld [smem:[#allocation3 + $0x3e]]
    %s519 = scalar_lea.vmem %s2, %s518
    %v520 = vld [vmem:[%s519] sm:$0x1]
    %s521 = sld [smem:[#allocation4 + $0x3e]]
    %s522 = scalar_lea.vmem %s2, %s521
    %v523 = vld [vmem:[%s522] sm:$0x1]
    %v524 = vadd.f32 %v520, %v523
    %525 = vst.msk [vmem:[#allocation5 + $0x3e] sm:$0x1] %vm28, %v524
    %s526 = sld [smem:[#allocation3 + $0x3f]]
    %s527 = scalar_lea.vmem %s2, %s526
    %v528 = vld [vmem:[%s527] sm:$0x1]
    %s529 = sld [smem:[#allocation4 + $0x3f]]
    %s530 = scalar_lea.vmem %s2, %s529
    %v531 = vld [vmem:[%s530] sm:$0x1]
    %v532 = vadd.f32 %v528, %v531
    %533 = vst.msk [vmem:[#allocation5 + $0x3f] sm:$0x1] %vm28, %v532
    %v534 = vld [vmem:[#allocation5] sm:$0xff]
    %v535 = vld [vmem:[#allocation5 + $0x8] sm:$0xff]
    %v536 = vld [vmem:[#allocation5 + $0x10] sm:$0xff]
    %v537 = vld [vmem:[#allocation5 + $0x18] sm:$0xff]
    %v538 = vld [vmem:[#allocation5 + $0x20] sm:$0xff]
    %v539 = vld [vmem:[#allocation5 + $0x28] sm:$0xff]
    %v540 = vld [vmem:[#allocation5 + $0x30] sm:$0xff]
    %v541 = vld [vmem:[#allocation5 + $0x38] sm:$0xff]
    %vm542 = vcmask 261120
    %v543 = vsel %vm542, %v534, 0.0
    %544 = vadd.xlane.f32.xlu0 %v543
    %v545 = vpop.xlane.xlu0 %544
    %v546 = vsel %vm542, %v535, 0.0
    %547 = vadd.xlane.f32.xlu0 %v546
    %v548 = vpop.xlane.xlu0 %547
    %v549 = vsel %vm542, %v536, 0.0
    %550 = vadd.xlane.f32.xlu0 %v549
    %v551 = vpop.xlane.xlu0 %550
    %v552 = vsel %vm542, %v537, 0.0
    %553 = vadd.xlane.f32.xlu0 %v552
    %v554 = vpop.xlane.xlu0 %553
    %v555 = vsel %vm542, %v538, 0.0
    %556 = vadd.xlane.f32.xlu0 %v555
    %v557 = vpop.xlane.xlu0 %556
    %v558 = vsel %vm542, %v539, 0.0
    %559 = vadd.xlane.f32.xlu0 %v558
    %v560 = vpop.xlane.xlu0 %559
    %v561 = vsel %vm542, %v540, 0.0
    %562 = vadd.xlane.f32.xlu0 %v561
    %v563 = vpop.xlane.xlu0 %562
    %v564 = vsel %vm542, %v541, 0.0
    %565 = vadd.xlane.f32.xlu0 %v564
    %v566 = vpop.xlane.xlu0 %565
    %v567 = vrcp.pop 32.0
    %v568 = vmul.f32 %v545, %v567
    %v569 = vmul.f32 %v548, %v567
    %v570 = vmul.f32 %v551, %v567
    %v571 = vmul.f32 %v554, %v567
    %v572 = vmul.f32 %v557, %v567
    %v573 = vmul.f32 %v560, %v567
    %v574 = vmul.f32 %v563, %v567
    %v575 = vmul.f32 %v566, %v567
    %v576 = vsub.f32 %v534, %v568
    %v577 = vsub.f32 %v535, %v569
    %v578 = vsub.f32 %v536, %v570
    %v579 = vsub.f32 %v537, %v571
    %v580 = vsub.f32 %v538, %v572
    %v581 = vsub.f32 %v539, %v573
    %v582 = vsub.f32 %v540, %v574
    %v583 = vsub.f32 %v541, %v575
    %v584 = vmul.f32 %v576, %v576
    %v585 = vmul.f32 %v577, %v577
    %v586 = vmul.f32 %v578, %v578
    %v587 = vmul.f32 %v579, %v579
    %v588 = vmul.f32 %v580, %v580
    %v589 = vmul.f32 %v581, %v581
    %v590 = vmul.f32 %v582, %v582
    %v591 = vmul.f32 %v583, %v583
    %v592 = vsel %vm542, %v584, 0.0
    %593 = vadd.xlane.f32.xlu0 %v592
    %v594 = vpop.xlane.xlu0 %593
    %v595 = vsel %vm542, %v585, 0.0
    %596 = vadd.xlane.f32.xlu0 %v595
    %v597 = vpop.xlane.xlu0 %596
    %v598 = vsel %vm542, %v586, 0.0
    %599 = vadd.xlane.f32.xlu0 %v598
    %v600 = vpop.xlane.xlu0 %599
    %v601 = vsel %vm542, %v587, 0.0
    %602 = vadd.xlane.f32.xlu0 %v601
    %v603 = vpop.xlane.xlu0 %602
    %v604 = vsel %vm542, %v588, 0.0
    %605 = vadd.xlane.f32.xlu0 %v604
    %v606 = vpop.xlane.xlu0 %605
    %v607 = vsel %vm542, %v589, 0.0
    %608 = vadd.xlane.f32.xlu0 %v607
    %v609 = vpop.xlane.xlu0 %608
    %v610 = vsel %vm542, %v590, 0.0
    %611 = vadd.xlane.f32.xlu0 %v610
    %v612 = vpop.xlane.xlu0 %611
    %v613 = vsel %vm542, %v591, 0.0
    %614 = vadd.xlane.f32.xlu0 %v613
    %v615 = vpop.xlane.xlu0 %614
    %v616 = vmul.f32 %v594, %v567
    %v617 = vmul.f32 %v597, %v567
    %v618 = vmul.f32 %v600, %v567
    %v619 = vmul.f32 %v603, %v567
    %v620 = vmul.f32 %v606, %v567
    %v621 = vmul.f32 %v609, %v567
    %v622 = vmul.f32 %v612, %v567
    %v623 = vmul.f32 %v615, %v567
    %v624 = vadd.f32 %v616, 1e-05
    %v625 = vadd.f32 %v617, 1e-05
    %v626 = vadd.f32 %v618, 1e-05
    %v627 = vadd.f32 %v619, 1e-05
    %v628 = vadd.f32 %v620, 1e-05
    %v629 = vadd.f32 %v621, 1e-05
    %v630 = vadd.f32 %v622, 1e-05
    %v631 = vadd.f32 %v623, 1e-05
    %v632 = vrsqrt.pop %v624
    %v633 = vrsqrt.pop %v625
    %v634 = vrsqrt.pop %v626
    %v635 = vrsqrt.pop %v627
    %v636 = vrsqrt.pop %v628
    %v637 = vrsqrt.pop %v629
    %v638 = vrsqrt.pop %v630
    %v639 = vrsqrt.pop %v631
    %v640 = vmul.f32 %v576, %v632
    %v641 = vmul.f32 %v577, %v633
    %v642 = vmul.f32 %v578, %v634
    %v643 = vmul.f32 %v579, %v635
    %v644 = vmul.f32 %v580, %v636
    %v645 = vmul.f32 %v581, %v637
    %v646 = vmul.f32 %v582, %v638
    %v647 = vmul.f32 %v583, %v639
    %648 = vst.msk [vmem:[#allocation5] sm:$0xff] %vm542, %v640
    %649 = vst.msk [vmem:[#allocation5 + $0x8] sm:$0xff] %vm542, %v641
    %650 = vst.msk [vmem:[#allocation5 + $0x10] sm:$0xff] %vm542, %v642
    %651 = vst.msk [vmem:[#allocation5 + $0x18] sm:$0xff] %vm542, %v643
    %652 = vst.msk [vmem:[#allocation5 + $0x20] sm:$0xff] %vm542, %v644
    %653 = vst.msk [vmem:[#allocation5 + $0x28] sm:$0xff] %vm542, %v645
    %654 = vst.msk [vmem:[#allocation5 + $0x30] sm:$0xff] %vm542, %v646
    %655 = vst.msk [vmem:[#allocation5 + $0x38] sm:$0xff] %vm542, %v647
    // Predicated region
    $region6: #{relationship_attention.3} parent=1 // pred_check
      _
    $region7: #{relationship_attention.3} parent=1 // pred_check_branch
      %657 = sbr.rel (0) target = $region9
    $region8: #{relationship_attention.3} parent=1 // pred_region
      %s659 = ssub.s32 1024, 1024
      %660 = vsyncadd [#allocation6], %s659
      %s661 = sshll.u32 [#allocation5], 4
      %s662 = int_to_ptr.vmem [resolvable:$true] %s661
      %667 = dma.vmem_to_hbm [thread:$0]  %s662, 1024, %s3, [#allocation6], 128, 128, 8
    $region9: #{relationship_attention.3} parent=1 // pred_fallthru
      _
    // Predicated region
    $region10: #{relationship_attention.3} parent=1 // pred_check
      _
    $region11: #{relationship_attention.3} parent=1 // pred_check_branch
      %669 = sbr.rel (0) target = $region13
    $region12: #{relationship_attention.3} parent=1 // pred_region
      %670 = dma.done [#allocation6], 1024
    $region13: #{relationship_attention.3} parent=1 // pred_fallthru
      _
    %671 = vsyncpa [#allocation6], 1

</llo_original>
